<compile_context>
chip_gen: v7x
topology: tpu7x:2x2x1
jax: 0.10.0
libtpu: 0.0.40
codegen_flags: <defaults>
</compile_context>

<pallas_src>
import jax
import jax.numpy as jnp
from jax import lax
from jax.experimental import pallas as pl
from jax.experimental.pallas import tpu as pltpu


def _lstm_stack_kernel(x_ref,
                       wih1_ref, whh1_ref, b1_ref,
                       w2f_ref, b2_ref,
                       wlin_ref, blin_ref,
                       out_ref,
                       xproj_ref, h2seq_ref):
    T = x_ref.shape[0]
    H1 = whh1_ref.shape[0]          # whh1 is (H1, 4*H1) after pre-transpose
    H2 = h2seq_ref.shape[1]

    # ---- Hoisted layer-1 input projection (+ folded bias) for all timesteps:
    #      one (T, in) @ (in, 4*H1) MXU matmul instead of T M=1 matmuls.
    xproj_ref[...] = (
        jnp.dot(x_ref[...], wih1_ref[...], preferred_element_type=jnp.float32)
        + b1_ref[...])

    # ---- Loop-invariant loads hoisted out of the recurrence.
    whh1 = whh1_ref[...]            # (H1, 4*H1)
    w2f = w2f_ref[...]              # (H1+H2, 4*H2)  == [W_ih2; W_hh2]
    b2 = b2_ref[...]                # (1, 4*H2)

    def step(t, carry):
        h1, c1, h2, c2 = carry

        # ---- LSTM layer 1: only the recurrent matmul is on the serial chain.
        g1 = xproj_ref[pl.ds(t, 1), :] + jnp.dot(
            h1, whh1, preferred_element_type=jnp.float32)        # (1, 4*H1)
        sig1 = jax.nn.sigmoid(g1)                                 # vreg-wide EUP
        tnh1 = jnp.tanh(g1)
        i1 = sig1[:, 0:H1]
        f1 = sig1[:, H1:2 * H1]
        gg1 = tnh1[:, 2 * H1:3 * H1]
        o1 = sig1[:, 3 * H1:4 * H1]
        c1n = f1 * c1 + i1 * gg1
        h1n = o1 * jnp.tanh(c1n)

        # ---- LSTM layer 2: single K-fused matmul on concat([h1n, h2]).
        hcat = jnp.concatenate([h1n, h2], axis=1)                 # (1, H1+H2)
        g2 = jnp.dot(hcat, w2f, preferred_element_type=jnp.float32) + b2
        sig2 = jax.nn.sigmoid(g2)
        tnh2 = jnp.tanh(g2)
        i2 = sig2[:, 0:H2]
        f2 = sig2[:, H2:2 * H2]
        gg2 = tnh2[:, 2 * H2:3 * H2]
        o2 = sig2[:, 3 * H2:4 * H2]
        c2n = f2 * c2 + i2 * gg2
        h2n = o2 * jnp.tanh(c2n)

        # Stash h2 for the batched linear head after the loop.
        h2seq_ref[pl.ds(t, 1), :] = h2n

        return (h1n, c1n, h2n, c2n)

    init = (jnp.zeros((1, H1), jnp.float32), jnp.zeros((1, H1), jnp.float32),
            jnp.zeros((1, H2), jnp.float32), jnp.zeros((1, H2), jnp.float32))
    # T is static and small: fully unroll so independent work of step t+1 can
    # hide under MXU/EUP FIFO latency of step t.
    lax.fori_loop(0, T, step, init, unroll=True)

    # ---- Linear head out of the loop: one (T, H2) @ (H2, out) matmul and a
    #      single slab store to the output.
    out_ref[...] = (
        jnp.dot(h2seq_ref[...], wlin_ref[...],
                preferred_element_type=jnp.float32)
        + blin_ref[...]).astype(out_ref.dtype)


def lstm_model_forward(x, params):
    """x: (T, input_size) float32.  Returns (T, out_size) float32."""
    (w_ih1, w_hh1, b_ih1, b_hh1,
     w_ih2, w_hh2, b_ih2, b_hh2,
     w_lin, b_lin) = params

    T = x.shape[0]
    H1 = w_hh1.shape[1]
    H2 = w_hh2.shape[1]
    out_size = w_lin.shape[0]

    # Parameter glue (plain JAX): pre-transpose so the kernel hot path is
    # row-vector @ matrix; fold PyTorch's two LSTM biases (b_ih + b_hh); fuse
    # the layer-2 input & recurrent weights along K.
    wih1_t = w_ih1.T                                        # (input_size, 4*H1)
    whh1_t = w_hh1.T                                        # (H1, 4*H1)
    b1 = (b_ih1 + b_hh1).reshape(1, -1)                     # (1, 4*H1)
    w2_fused = jnp.concatenate([w_ih2.T, w_hh2.T], axis=0)  # (H1+H2, 4*H2)
    b2 = (b_ih2 + b_hh2).reshape(1, -1)                     # (1, 4*H2)
    wlin_t = w_lin.T                                        # (H2, out_size)
    blin = b_lin.reshape(1, -1)                             # (1, out_size)

    vmem = pl.BlockSpec(memory_space=pltpu.MemorySpace.VMEM)
    # TODO(synk): the nn.Module carries (h, c) across forward() calls via
    # self.hidden_*; this kernel reproduces a forward from the zero-init state.
    return pl.pallas_call(
        _lstm_stack_kernel,
        out_shape=jax.ShapeDtypeStruct((T, out_size), jnp.float32),
        in_specs=[vmem] * 8,
        out_specs=vmem,
        scratch_shapes=[
            pltpu.VMEM((T, 4 * H1), jnp.float32),   # hoisted input projection
            pltpu.VMEM((T, H2), jnp.float32),       # per-step h2 for linear head
        ],
    )(x, wih1_t, whh1_t, b1, w2_fused, b2, wlin_t, blin)


def init_params(key, input_size, h1, h2, out_size):
    """Deterministic PyTorch-style uniform(-1/sqrt(H), 1/sqrt(H)) init."""
    ks = jax.random.split(key, 10)
    k1 = 1.0 / jnp.sqrt(h1)
    k2 = 1.0 / jnp.sqrt(h2)

    def u(k, shape, scale):
        return jax.random.uniform(k, shape, jnp.float32, -scale, scale)

    w_ih1 = u(ks[0], (4 * h1, input_size), k1)
    w_hh1 = u(ks[1], (4 * h1, h1), k1)
    b_ih1 = u(ks[2], (4 * h1,), k1)
    b_hh1 = u(ks[3], (4 * h1,), k1)
    w_ih2 = u(ks[4], (4 * h2, h1), k2)
    w_hh2 = u(ks[5], (4 * h2, h2), k2)
    b_ih2 = u(ks[6], (4 * h2,), k2)
    b_hh2 = u(ks[7], (4 * h2,), k2)
    w_lin = u(ks[8], (out_size, h2), k2)
    b_lin = u(ks[9], (out_size,), k2)
    return (w_ih1, w_hh1, b_ih1, b_hh1,
            w_ih2, w_hh2, b_ih2, b_hh2,
            w_lin, b_lin)


def reference_forward(x, params):
    """Pure-JAX reference with identical semantics (for validation)."""
    (w_ih1, w_hh1, b_ih1, b_hh1,
     w_ih2, w_hh2, b_ih2, b_hh2,
     w_lin, b_lin) = params
    h1_size = w_hh1.shape[1]
    h2_size = w_hh2.shape[1]

    def cell(x_t, h, c, w_ih, w_hh, b_ih, b_hh, H):
        g = x_t @ w_ih.T + h @ w_hh.T + b_ih + b_hh
        i = jax.nn.sigmoid(g[..., 0:H])
        f = jax.nn.sigmoid(g[..., H:2 * H])
        gg = jnp.tanh(g[..., 2 * H:3 * H])
        o = jax.nn.sigmoid(g[..., 3 * H:4 * H])
        c_n = f * c + i * gg
        h_n = o * jnp.tanh(c_n)
        return h_n, c_n

    def scan_fn(carry, x_t):
        h1, c1, h2, c2 = carry
        h1, c1 = cell(x_t, h1, c1, w_ih1, w_hh1, b_ih1, b_hh1, h1_size)
        h2, c2 = cell(h1, h2, c2, w_ih2, w_hh2, b_ih2, b_hh2, h2_size)
        return (h1, c1, h2, c2), h2

    init = (jnp.zeros((h1_size,)), jnp.zeros((h1_size,)),
            jnp.zeros((h2_size,)), jnp.zeros((h2_size,)))
    _, h2_seq = lax.scan(scan_fn, init, x)
    return h2_seq @ w_lin.T + b_lin


if __name__ == "__main__":
    INPUT_SIZE = 4
    H1 = 32
    H2 = 16
    OUT_SIZE = 1
    T = 8

    key = jax.random.PRNGKey(0)
    k_x, k_p = jax.random.split(key)
    # seq: the PyTorch forward views it as (T, 1, INPUT_SIZE); we feed (T, INPUT_SIZE).
    x = jax.random.normal(k_x, (T, INPUT_SIZE), dtype=jnp.float32)
    params = init_params(k_p, INPUT_SIZE, H1, H2, OUT_SIZE)

    pred = lstm_model_forward(x, params)
    pred = jax.block_until_ready(pred)

    ref = jax.block_until_ready(reference_forward(x, params))
    assert pred.shape == (T, OUT_SIZE)
    assert jnp.allclose(pred, ref, rtol=1e-5, atol=1e-5)

    print("KERNEL_OK")
</pallas_src>

<mosaic_0001>
module attributes {stable_mosaic.version = 11 : i64} {
  func.func @_lstm_stack_kernel(%arg0: memref<8x4xf32, #tpu.memory_space<vmem>>, %arg1: memref<4x128xf32, #tpu.memory_space<vmem>>, %arg2: memref<32x128xf32, #tpu.memory_space<vmem>>, %arg3: memref<1x128xf32, #tpu.memory_space<vmem>>, %arg4: memref<48x64xf32, #tpu.memory_space<vmem>>, %arg5: memref<1x64xf32, #tpu.memory_space<vmem>>, %arg6: memref<16x1xf32, #tpu.memory_space<vmem>>, %arg7: memref<1x1xf32, #tpu.memory_space<vmem>>, %arg8: memref<8x1xf32, #tpu.memory_space<vmem>>, %arg9: memref<8x128xf32, #tpu.memory_space<vmem>>, %arg10: memref<8x16xf32, #tpu.memory_space<vmem>>) attributes {dimension_semantics = [], scalar_prefetch = 0 : i64, scratch_operands = 2 : i64, tpu.core_type = #tpu.core_type<tc>} {
    %c0 = arith.constant 0 : index
    %c0_0 = arith.constant 0 : index
    %0 = vector.load %arg0[%c0, %c0_0] : memref<8x4xf32, #tpu.memory_space<vmem>>, vector<8x4xf32>
    %c0_1 = arith.constant 0 : index
    %c0_2 = arith.constant 0 : index
    %1 = vector.load %arg1[%c0_1, %c0_2] : memref<4x128xf32, #tpu.memory_space<vmem>>, vector<4x128xf32>
    %cst = arith.constant dense<0.000000e+00> : vector<8x128xf32>
    %2 = tpu.matmul %0, %1, %cst {dimension_numbers = #tpu.dot_dimension_numbers<[1], [0], [0], [1], [0, 0, 1, 1], [], []>} : vector<8x4xf32>, vector<4x128xf32>, vector<8x128xf32> -> vector<8x128xf32>
    %c0_3 = arith.constant 0 : index
    %c0_4 = arith.constant 0 : index
    %3 = vector.load %arg3[%c0_3, %c0_4] : memref<1x128xf32, #tpu.memory_space<vmem>>, vector<1x128xf32>
    %4 = vector.broadcast %3 : vector<1x128xf32> to vector<8x128xf32>
    %5 = arith.addf %2, %4 : vector<8x128xf32>
    %c0_5 = arith.constant 0 : index
    %c0_6 = arith.constant 0 : index
    %6 = vector.load %arg9[%c0_5, %c0_6] : memref<8x128xf32, #tpu.memory_space<vmem>>, vector<8x128xf32>
    tpu.vector_store %arg9[%c0_5, %c0_6], %5 {strides = array<i32>} : memref<8x128xf32, #tpu.memory_space<vmem>>, vector<8x128xf32>,
    %c0_7 = arith.constant 0 : index
    %c0_8 = arith.constant 0 : index
    %7 = vector.load %arg2[%c0_7, %c0_8] : memref<32x128xf32, #tpu.memory_space<vmem>>, vector<32x128xf32>
    %c0_9 = arith.constant 0 : index
    %c0_10 = arith.constant 0 : index
    %8 = vector.load %arg4[%c0_9, %c0_10] : memref<48x64xf32, #tpu.memory_space<vmem>>, vector<48x64xf32>
    %c0_11 = arith.constant 0 : index
    %c0_12 = arith.constant 0 : index
    %9 = vector.load %arg5[%c0_11, %c0_12] : memref<1x64xf32, #tpu.memory_space<vmem>>, vector<1x64xf32>
    %cst_13 = arith.constant 0.000000e+00 : f32
    %10 = vector.broadcast %cst_13 : f32 to vector<1x32xf32>
    %cst_14 = arith.constant 0.000000e+00 : f32
    %11 = vector.broadcast %cst_14 : f32 to vector<1x32xf32>
    %cst_15 = arith.constant 0.000000e+00 : f32
    %12 = vector.broadcast %cst_15 : f32 to vector<1x16xf32>
    %cst_16 = arith.constant 0.000000e+00 : f32
    %13 = vector.broadcast %cst_16 : f32 to vector<1x16xf32>
    %c0_i32 = arith.constant 0 : i32
    %14 = arith.index_cast %c0_i32 : i32 to index
    %c0_17 = arith.constant 0 : index
    %15 = vector.load %arg9[%14, %c0_17] : memref<8x128xf32, #tpu.memory_space<vmem>>, vector<1x128xf32>
    %cst_18 = arith.constant dense<0.000000e+00> : vector<1x128xf32>
    %16 = tpu.matmul %10, %7, %cst_18 {dimension_numbers = #tpu.dot_dimension_numbers<[1], [0], [0], [1], [0, 0, 1, 1], [], []>} : vector<1x32xf32>, vector<32x128xf32>, vector<1x128xf32> -> vector<1x128xf32>
    %17 = arith.addf %15, %16 : vector<1x128xf32>
    %18 = arith.negf %17 : vector<1x128xf32>
    %19 = math.exp %18 : vector<1x128xf32>
    %cst_19 = arith.constant 1.000000e+00 : f32
    %20 = vector.broadcast %cst_19 : f32 to vector<1x128xf32>
    %21 = arith.addf %20, %19 : vector<1x128xf32>
    %22 = arith.divf %20, %21 : vector<1x128xf32>
    %23 = math.tanh %17 : vector<1x128xf32>
    %24 = vector.extract_strided_slice %22 {offsets = [0, 0], sizes = [1, 32], strides = [1, 1]} : vector<1x128xf32> to vector<1x32xf32>
    %25 = vector.extract_strided_slice %22 {offsets = [0, 32], sizes = [1, 32], strides = [1, 1]} : vector<1x128xf32> to vector<1x32xf32>
    %26 = vector.extract_strided_slice %23 {offsets = [0, 64], sizes = [1, 32], strides = [1, 1]} : vector<1x128xf32> to vector<1x32xf32>
    %27 = vector.extract_strided_slice %22 {offsets = [0, 96], sizes = [1, 32], strides = [1, 1]} : vector<1x128xf32> to vector<1x32xf32>
    %28 = arith.mulf %25, %11 : vector<1x32xf32>
    %29 = arith.mulf %24, %26 : vector<1x32xf32>
    %30 = arith.addf %28, %29 : vector<1x32xf32>
    %31 = math.tanh %30 : vector<1x32xf32>
    %32 = arith.mulf %27, %31 : vector<1x32xf32>
    %33 = tpu.concatenate %32, %12 in 1 : vector<1x32xf32>, vector<1x16xf32> -> vector<1x48xf32>
    %cst_20 = arith.constant dense<0.000000e+00> : vector<1x64xf32>
    %34 = tpu.matmul %33, %8, %cst_20 {dimension_numbers = #tpu.dot_dimension_numbers<[1], [0], [0], [1], [0, 0, 1, 1], [], []>} : vector<1x48xf32>, vector<48x64xf32>, vector<1x64xf32> -> vector<1x64xf32>
    %35 = arith.addf %34, %9 : vector<1x64xf32>
    %36 = arith.negf %35 : vector<1x64xf32>
    %37 = math.exp %36 : vector<1x64xf32>
    %cst_21 = arith.constant 1.000000e+00 : f32
    %38 = vector.broadcast %cst_21 : f32 to vector<1x64xf32>
    %39 = arith.addf %38, %37 : vector<1x64xf32>
    %40 = arith.divf %38, %39 : vector<1x64xf32>
    %41 = math.tanh %35 : vector<1x64xf32>
    %42 = vector.extract_strided_slice %40 {offsets = [0, 0], sizes = [1, 16], strides = [1, 1]} : vector<1x64xf32> to vector<1x16xf32>
    %43 = vector.extract_strided_slice %40 {offsets = [0, 16], sizes = [1, 16], strides = [1, 1]} : vector<1x64xf32> to vector<1x16xf32>
    %44 = vector.extract_strided_slice %41 {offsets = [0, 32], sizes = [1, 16], strides = [1, 1]} : vector<1x64xf32> to vector<1x16xf32>
    %45 = vector.extract_strided_slice %40 {offsets = [0, 48], sizes = [1, 16], strides = [1, 1]} : vector<1x64xf32> to vector<1x16xf32>
    %46 = arith.mulf %43, %13 : vector<1x16xf32>
    %47 = arith.mulf %42, %44 : vector<1x16xf32>
    %48 = arith.addf %46, %47 : vector<1x16xf32>
    %49 = math.tanh %48 : vector<1x16xf32>
    %50 = arith.mulf %45, %49 : vector<1x16xf32>
    %51 = arith.index_cast %c0_i32 : i32 to index
    %c0_22 = arith.constant 0 : index
    %52 = vector.load %arg10[%51, %c0_22] : memref<8x16xf32, #tpu.memory_space<vmem>>, vector<1x16xf32>
    tpu.vector_store %arg10[%51, %c0_22], %50 {strides = array<i32>} : memref<8x16xf32, #tpu.memory_space<vmem>>, vector<1x16xf32>,
    %c1_i32 = arith.constant 1 : i32
    %53 = arith.index_cast %c1_i32 : i32 to index
    %c0_23 = arith.constant 0 : index
    %54 = vector.load %arg9[%53, %c0_23] : memref<8x128xf32, #tpu.memory_space<vmem>>, vector<1x128xf32>
    %cst_24 = arith.constant dense<0.000000e+00> : vector<1x128xf32>
    %55 = tpu.matmul %32, %7, %cst_24 {dimension_numbers = #tpu.dot_dimension_numbers<[1], [0], [0], [1], [0, 0, 1, 1], [], []>} : vector<1x32xf32>, vector<32x128xf32>, vector<1x128xf32> -> vector<1x128xf32>
    %56 = arith.addf %54, %55 : vector<1x128xf32>
    %57 = arith.negf %56 : vector<1x128xf32>
    %58 = math.exp %57 : vector<1x128xf32>
    %cst_25 = arith.constant 1.000000e+00 : f32
    %59 = vector.broadcast %cst_25 : f32 to vector<1x128xf32>
    %60 = arith.addf %59, %58 : vector<1x128xf32>
    %61 = arith.divf %59, %60 : vector<1x128xf32>
    %62 = math.tanh %56 : vector<1x128xf32>
    %63 = vector.extract_strided_slice %61 {offsets = [0, 0], sizes = [1, 32], strides = [1, 1]} : vector<1x128xf32> to vector<1x32xf32>
    %64 = vector.extract_strided_slice %61 {offsets = [0, 32], sizes = [1, 32], strides = [1, 1]} : vector<1x128xf32> to vector<1x32xf32>
    %65 = vector.extract_strided_slice %62 {offsets = [0, 64], sizes = [1, 32], strides = [1, 1]} : vector<1x128xf32> to vector<1x32xf32>
    %66 = vector.extract_strided_slice %61 {offsets = [0, 96], sizes = [1, 32], strides = [1, 1]} : vector<1x128xf32> to vector<1x32xf32>
    %67 = arith.mulf %64, %30 : vector<1x32xf32>
    %68 = arith.mulf %63, %65 : vector<1x32xf32>
    %69 = arith.addf %67, %68 : vector<1x32xf32>
    %70 = math.tanh %69 : vector<1x32xf32>
    %71 = arith.mulf %66, %70 : vector<1x32xf32>
    %72 = tpu.concatenate %71, %50 in 1 : vector<1x32xf32>, vector<1x16xf32> -> vector<1x48xf32>
    %cst_26 = arith.constant dense<0.000000e+00> : vector<1x64xf32>
    %73 = tpu.matmul %72, %8, %cst_26 {dimension_numbers = #tpu.dot_dimension_numbers<[1], [0], [0], [1], [0, 0, 1, 1], [], []>} : vector<1x48xf32>, vector<48x64xf32>, vector<1x64xf32> -> vector<1x64xf32>
    %74 = arith.addf %73, %9 : vector<1x64xf32>
    %75 = arith.negf %74 : vector<1x64xf32>
    %76 = math.exp %75 : vector<1x64xf32>
    %cst_27 = arith.constant 1.000000e+00 : f32
    %77 = vector.broadcast %cst_27 : f32 to vector<1x64xf32>
    %78 = arith.addf %77, %76 : vector<1x64xf32>
    %79 = arith.divf %77, %78 : vector<1x64xf32>
    %80 = math.tanh %74 : vector<1x64xf32>
    %81 = vector.extract_strided_slice %79 {offsets = [0, 0], sizes = [1, 16], strides = [1, 1]} : vector<1x64xf32> to vector<1x16xf32>
    %82 = vector.extract_strided_slice %79 {offsets = [0, 16], sizes = [1, 16], strides = [1, 1]} : vector<1x64xf32> to vector<1x16xf32>
    %83 = vector.extract_strided_slice %80 {offsets = [0, 32], sizes = [1, 16], strides = [1, 1]} : vector<1x64xf32> to vector<1x16xf32>
    %84 = vector.extract_strided_slice %79 {offsets = [0, 48], sizes = [1, 16], strides = [1, 1]} : vector<1x64xf32> to vector<1x16xf32>
    %85 = arith.mulf %82, %48 : vector<1x16xf32>
    %86 = arith.mulf %81, %83 : vector<1x16xf32>
    %87 = arith.addf %85, %86 : vector<1x16xf32>
    %88 = math.tanh %87 : vector<1x16xf32>
    %89 = arith.mulf %84, %88 : vector<1x16xf32>
    %90 = arith.index_cast %c1_i32 : i32 to index
    %c0_28 = arith.constant 0 : index
    %91 = vector.load %arg10[%90, %c0_28] : memref<8x16xf32, #tpu.memory_space<vmem>>, vector<1x16xf32>
    tpu.vector_store %arg10[%90, %c0_28], %89 {strides = array<i32>} : memref<8x16xf32, #tpu.memory_space<vmem>>, vector<1x16xf32>,
    %c2_i32 = arith.constant 2 : i32
    %92 = arith.index_cast %c2_i32 : i32 to index
    %c0_29 = arith.constant 0 : index
    %93 = vector.load %arg9[%92, %c0_29] : memref<8x128xf32, #tpu.memory_space<vmem>>, vector<1x128xf32>
    %cst_30 = arith.constant dense<0.000000e+00> : vector<1x128xf32>
    %94 = tpu.matmul %71, %7, %cst_30 {dimension_numbers = #tpu.dot_dimension_numbers<[1], [0], [0], [1], [0, 0, 1, 1], [], []>} : vector<1x32xf32>, vector<32x128xf32>, vector<1x128xf32> -> vector<1x128xf32>
    %95 = arith.addf %93, %94 : vector<1x128xf32>
    %96 = arith.negf %95 : vector<1x128xf32>
    %97 = math.exp %96 : vector<1x128xf32>
    %cst_31 = arith.constant 1.000000e+00 : f32
    %98 = vector.broadcast %cst_31 : f32 to vector<1x128xf32>
    %99 = arith.addf %98, %97 : vector<1x128xf32>
    %100 = arith.divf %98, %99 : vector<1x128xf32>
    %101 = math.tanh %95 : vector<1x128xf32>
    %102 = vector.extract_strided_slice %100 {offsets = [0, 0], sizes = [1, 32], strides = [1, 1]} : vector<1x128xf32> to vector<1x32xf32>
    %103 = vector.extract_strided_slice %100 {offsets = [0, 32], sizes = [1, 32], strides = [1, 1]} : vector<1x128xf32> to vector<1x32xf32>
    %104 = vector.extract_strided_slice %101 {offsets = [0, 64], sizes = [1, 32], strides = [1, 1]} : vector<1x128xf32> to vector<1x32xf32>
    %105 = vector.extract_strided_slice %100 {offsets = [0, 96], sizes = [1, 32], strides = [1, 1]} : vector<1x128xf32> to vector<1x32xf32>
    %106 = arith.mulf %103, %69 : vector<1x32xf32>
    %107 = arith.mulf %102, %104 : vector<1x32xf32>
    %108 = arith.addf %106, %107 : vector<1x32xf32>
    %109 = math.tanh %108 : vector<1x32xf32>
    %110 = arith.mulf %105, %109 : vector<1x32xf32>
    %111 = tpu.concatenate %110, %89 in 1 : vector<1x32xf32>, vector<1x16xf32> -> vector<1x48xf32>
    %cst_32 = arith.constant dense<0.000000e+00> : vector<1x64xf32>
    %112 = tpu.matmul %111, %8, %cst_32 {dimension_numbers = #tpu.dot_dimension_numbers<[1], [0], [0], [1], [0, 0, 1, 1], [], []>} : vector<1x48xf32>, vector<48x64xf32>, vector<1x64xf32> -> vector<1x64xf32>
    %113 = arith.addf %112, %9 : vector<1x64xf32>
    %114 = arith.negf %113 : vector<1x64xf32>
    %115 = math.exp %114 : vector<1x64xf32>
    %cst_33 = arith.constant 1.000000e+00 : f32
    %116 = vector.broadcast %cst_33 : f32 to vector<1x64xf32>
    %117 = arith.addf %116, %115 : vector<1x64xf32>
    %118 = arith.divf %116, %117 : vector<1x64xf32>
    %119 = math.tanh %113 : vector<1x64xf32>
    %120 = vector.extract_strided_slice %118 {offsets = [0, 0], sizes = [1, 16], strides = [1, 1]} : vector<1x64xf32> to vector<1x16xf32>
    %121 = vector.extract_strided_slice %118 {offsets = [0, 16], sizes = [1, 16], strides = [1, 1]} : vector<1x64xf32> to vector<1x16xf32>
    %122 = vector.extract_strided_slice %119 {offsets = [0, 32], sizes = [1, 16], strides = [1, 1]} : vector<1x64xf32> to vector<1x16xf32>
    %123 = vector.extract_strided_slice %118 {offsets = [0, 48], sizes = [1, 16], strides = [1, 1]} : vector<1x64xf32> to vector<1x16xf32>
    %124 = arith.mulf %121, %87 : vector<1x16xf32>
    %125 = arith.mulf %120, %122 : vector<1x16xf32>
    %126 = arith.addf %124, %125 : vector<1x16xf32>
    %127 = math.tanh %126 : vector<1x16xf32>
    %128 = arith.mulf %123, %127 : vector<1x16xf32>
    %129 = arith.index_cast %c2_i32 : i32 to index
    %c0_34 = arith.constant 0 : index
    %130 = vector.load %arg10[%129, %c0_34] : memref<8x16xf32, #tpu.memory_space<vmem>>, vector<1x16xf32>
    tpu.vector_store %arg10[%129, %c0_34], %128 {strides = array<i32>} : memref<8x16xf32, #tpu.memory_space<vmem>>, vector<1x16xf32>,
    %c3_i32 = arith.constant 3 : i32
    %131 = arith.index_cast %c3_i32 : i32 to index
    %c0_35 = arith.constant 0 : index
    %132 = vector.load %arg9[%131, %c0_35] : memref<8x128xf32, #tpu.memory_space<vmem>>, vector<1x128xf32>
    %cst_36 = arith.constant dense<0.000000e+00> : vector<1x128xf32>
    %133 = tpu.matmul %110, %7, %cst_36 {dimension_numbers = #tpu.dot_dimension_numbers<[1], [0], [0], [1], [0, 0, 1, 1], [], []>} : vector<1x32xf32>, vector<32x128xf32>, vector<1x128xf32> -> vector<1x128xf32>
    %134 = arith.addf %132, %133 : vector<1x128xf32>
    %135 = arith.negf %134 : vector<1x128xf32>
    %136 = math.exp %135 : vector<1x128xf32>
    %cst_37 = arith.constant 1.000000e+00 : f32
    %137 = vector.broadcast %cst_37 : f32 to vector<1x128xf32>
    %138 = arith.addf %137, %136 : vector<1x128xf32>
    %139 = arith.divf %137, %138 : vector<1x128xf32>
    %140 = math.tanh %134 : vector<1x128xf32>
    %141 = vector.extract_strided_slice %139 {offsets = [0, 0], sizes = [1, 32], strides = [1, 1]} : vector<1x128xf32> to vector<1x32xf32>
    %142 = vector.extract_strided_slice %139 {offsets = [0, 32], sizes = [1, 32], strides = [1, 1]} : vector<1x128xf32> to vector<1x32xf32>
    %143 = vector.extract_strided_slice %140 {offsets = [0, 64], sizes = [1, 32], strides = [1, 1]} : vector<1x128xf32> to vector<1x32xf32>
    %144 = vector.extract_strided_slice %139 {offsets = [0, 96], sizes = [1, 32], strides = [1, 1]} : vector<1x128xf32> to vector<1x32xf32>
    %145 = arith.mulf %142, %108 : vector<1x32xf32>
    %146 = arith.mulf %141, %143 : vector<1x32xf32>
    %147 = arith.addf %145, %146 : vector<1x32xf32>
    %148 = math.tanh %147 : vector<1x32xf32>
    %149 = arith.mulf %144, %148 : vector<1x32xf32>
    %150 = tpu.concatenate %149, %128 in 1 : vector<1x32xf32>, vector<1x16xf32> -> vector<1x48xf32>
    %cst_38 = arith.constant dense<0.000000e+00> : vector<1x64xf32>
    %151 = tpu.matmul %150, %8, %cst_38 {dimension_numbers = #tpu.dot_dimension_numbers<[1], [0], [0], [1], [0, 0, 1, 1], [], []>} : vector<1x48xf32>, vector<48x64xf32>, vector<1x64xf32> -> vector<1x64xf32>
    %152 = arith.addf %151, %9 : vector<1x64xf32>
    %153 = arith.negf %152 : vector<1x64xf32>
    %154 = math.exp %153 : vector<1x64xf32>
    %cst_39 = arith.constant 1.000000e+00 : f32
    %155 = vector.broadcast %cst_39 : f32 to vector<1x64xf32>
    %156 = arith.addf %155, %154 : vector<1x64xf32>
    %157 = arith.divf %155, %156 : vector<1x64xf32>
    %158 = math.tanh %152 : vector<1x64xf32>
    %159 = vector.extract_strided_slice %157 {offsets = [0, 0], sizes = [1, 16], strides = [1, 1]} : vector<1x64xf32> to vector<1x16xf32>
    %160 = vector.extract_strided_slice %157 {offsets = [0, 16], sizes = [1, 16], strides = [1, 1]} : vector<1x64xf32> to vector<1x16xf32>
    %161 = vector.extract_strided_slice %158 {offsets = [0, 32], sizes = [1, 16], strides = [1, 1]} : vector<1x64xf32> to vector<1x16xf32>
    %162 = vector.extract_strided_slice %157 {offsets = [0, 48], sizes = [1, 16], strides = [1, 1]} : vector<1x64xf32> to vector<1x16xf32>
    %163 = arith.mulf %160, %126 : vector<1x16xf32>
    %164 = arith.mulf %159, %161 : vector<1x16xf32>
    %165 = arith.addf %163, %164 : vector<1x16xf32>
    %166 = math.tanh %165 : vector<1x16xf32>
    %167 = arith.mulf %162, %166 : vector<1x16xf32>
    %168 = arith.index_cast %c3_i32 : i32 to index
    %c0_40 = arith.constant 0 : index
    %169 = vector.load %arg10[%168, %c0_40] : memref<8x16xf32, #tpu.memory_space<vmem>>, vector<1x16xf32>
    tpu.vector_store %arg10[%168, %c0_40], %167 {strides = array<i32>} : memref<8x16xf32, #tpu.memory_space<vmem>>, vector<1x16xf32>,
    %c4_i32 = arith.constant 4 : i32
    %170 = arith.index_cast %c4_i32 : i32 to index
    %c0_41 = arith.constant 0 : index
    %171 = vector.load %arg9[%170, %c0_41] : memref<8x128xf32, #tpu.memory_space<vmem>>, vector<1x128xf32>
    %cst_42 = arith.constant dense<0.000000e+00> : vector<1x128xf32>
    %172 = tpu.matmul %149, %7, %cst_42 {dimension_numbers = #tpu.dot_dimension_numbers<[1], [0], [0], [1], [0, 0, 1, 1], [], []>} : vector<1x32xf32>, vector<32x128xf32>, vector<1x128xf32> -> vector<1x128xf32>
    %173 = arith.addf %171, %172 : vector<1x128xf32>
    %174 = arith.negf %173 : vector<1x128xf32>
    %175 = math.exp %174 : vector<1x128xf32>
    %cst_43 = arith.constant 1.000000e+00 : f32
    %176 = vector.broadcast %cst_43 : f32 to vector<1x128xf32>
    %177 = arith.addf %176, %175 : vector<1x128xf32>
    %178 = arith.divf %176, %177 : vector<1x128xf32>
    %179 = math.tanh %173 : vector<1x128xf32>
    %180 = vector.extract_strided_slice %178 {offsets = [0, 0], sizes = [1, 32], strides = [1, 1]} : vector<1x128xf32> to vector<1x32xf32>
    %181 = vector.extract_strided_slice %178 {offsets = [0, 32], sizes = [1, 32], strides = [1, 1]} : vector<1x128xf32> to vector<1x32xf32>
    %182 = vector.extract_strided_slice %179 {offsets = [0, 64], sizes = [1, 32], strides = [1, 1]} : vector<1x128xf32> to vector<1x32xf32>
    %183 = vector.extract_strided_slice %178 {offsets = [0, 96], sizes = [1, 32], strides = [1, 1]} : vector<1x128xf32> to vector<1x32xf32>
    %184 = arith.mulf %181, %147 : vector<1x32xf32>
    %185 = arith.mulf %180, %182 : vector<1x32xf32>
    %186 = arith.addf %184, %185 : vector<1x32xf32>
    %187 = math.tanh %186 : vector<1x32xf32>
    %188 = arith.mulf %183, %187 : vector<1x32xf32>
    %189 = tpu.concatenate %188, %167 in 1 : vector<1x32xf32>, vector<1x16xf32> -> vector<1x48xf32>
    %cst_44 = arith.constant dense<0.000000e+00> : vector<1x64xf32>
    %190 = tpu.matmul %189, %8, %cst_44 {dimension_numbers = #tpu.dot_dimension_numbers<[1], [0], [0], [1], [0, 0, 1, 1], [], []>} : vector<1x48xf32>, vector<48x64xf32>, vector<1x64xf32> -> vector<1x64xf32>
    %191 = arith.addf %190, %9 : vector<1x64xf32>
    %192 = arith.negf %191 : vector<1x64xf32>
    %193 = math.exp %192 : vector<1x64xf32>
    %cst_45 = arith.constant 1.000000e+00 : f32
    %194 = vector.broadcast %cst_45 : f32 to vector<1x64xf32>
    %195 = arith.addf %194, %193 : vector<1x64xf32>
    %196 = arith.divf %194, %195 : vector<1x64xf32>
    %197 = math.tanh %191 : vector<1x64xf32>
    %198 = vector.extract_strided_slice %196 {offsets = [0, 0], sizes = [1, 16], strides = [1, 1]} : vector<1x64xf32> to vector<1x16xf32>
    %199 = vector.extract_strided_slice %196 {offsets = [0, 16], sizes = [1, 16], strides = [1, 1]} : vector<1x64xf32> to vector<1x16xf32>
    %200 = vector.extract_strided_slice %197 {offsets = [0, 32], sizes = [1, 16], strides = [1, 1]} : vector<1x64xf32> to vector<1x16xf32>
    %201 = vector.extract_strided_slice %196 {offsets = [0, 48], sizes = [1, 16], strides = [1, 1]} : vector<1x64xf32> to vector<1x16xf32>
    %202 = arith.mulf %199, %165 : vector<1x16xf32>
    %203 = arith.mulf %198, %200 : vector<1x16xf32>
    %204 = arith.addf %202, %203 : vector<1x16xf32>
    %205 = math.tanh %204 : vector<1x16xf32>
    %206 = arith.mulf %201, %205 : vector<1x16xf32>
    %207 = arith.index_cast %c4_i32 : i32 to index
    %c0_46 = arith.constant 0 : index
    %208 = vector.load %arg10[%207, %c0_46] : memref<8x16xf32, #tpu.memory_space<vmem>>, vector<1x16xf32>
    tpu.vector_store %arg10[%207, %c0_46], %206 {strides = array<i32>} : memref<8x16xf32, #tpu.memory_space<vmem>>, vector<1x16xf32>,
    %c5_i32 = arith.constant 5 : i32
    %209 = arith.index_cast %c5_i32 : i32 to index
    %c0_47 = arith.constant 0 : index
    %210 = vector.load %arg9[%209, %c0_47] : memref<8x128xf32, #tpu.memory_space<vmem>>, vector<1x128xf32>
    %cst_48 = arith.constant dense<0.000000e+00> : vector<1x128xf32>
    %211 = tpu.matmul %188, %7, %cst_48 {dimension_numbers = #tpu.dot_dimension_numbers<[1], [0], [0], [1], [0, 0, 1, 1], [], []>} : vector<1x32xf32>, vector<32x128xf32>, vector<1x128xf32> -> vector<1x128xf32>
    %212 = arith.addf %210, %211 : vector<1x128xf32>
    %213 = arith.negf %212 : vector<1x128xf32>
    %214 = math.exp %213 : vector<1x128xf32>
    %cst_49 = arith.constant 1.000000e+00 : f32
    %215 = vector.broadcast %cst_49 : f32 to vector<1x128xf32>
    %216 = arith.addf %215, %214 : vector<1x128xf32>
    %217 = arith.divf %215, %216 : vector<1x128xf32>
    %218 = math.tanh %212 : vector<1x128xf32>
    %219 = vector.extract_strided_slice %217 {offsets = [0, 0], sizes = [1, 32], strides = [1, 1]} : vector<1x128xf32> to vector<1x32xf32>
    %220 = vector.extract_strided_slice %217 {offsets = [0, 32], sizes = [1, 32], strides = [1, 1]} : vector<1x128xf32> to vector<1x32xf32>
    %221 = vector.extract_strided_slice %218 {offsets = [0, 64], sizes = [1, 32], strides = [1, 1]} : vector<1x128xf32> to vector<1x32xf32>
    %222 = vector.extract_strided_slice %217 {offsets = [0, 96], sizes = [1, 32], strides = [1, 1]} : vector<1x128xf32> to vector<1x32xf32>
    %223 = arith.mulf %220, %186 : vector<1x32xf32>
    %224 = arith.mulf %219, %221 : vector<1x32xf32>
    %225 = arith.addf %223, %224 : vector<1x32xf32>
    %226 = math.tanh %225 : vector<1x32xf32>
    %227 = arith.mulf %222, %226 : vector<1x32xf32>
    %228 = tpu.concatenate %227, %206 in 1 : vector<1x32xf32>, vector<1x16xf32> -> vector<1x48xf32>
    %cst_50 = arith.constant dense<0.000000e+00> : vector<1x64xf32>
    %229 = tpu.matmul %228, %8, %cst_50 {dimension_numbers = #tpu.dot_dimension_numbers<[1], [0], [0], [1], [0, 0, 1, 1], [], []>} : vector<1x48xf32>, vector<48x64xf32>, vector<1x64xf32> -> vector<1x64xf32>
    %230 = arith.addf %229, %9 : vector<1x64xf32>
    %231 = arith.negf %230 : vector<1x64xf32>
    %232 = math.exp %231 : vector<1x64xf32>
    %cst_51 = arith.constant 1.000000e+00 : f32
    %233 = vector.broadcast %cst_51 : f32 to vector<1x64xf32>
    %234 = arith.addf %233, %232 : vector<1x64xf32>
    %235 = arith.divf %233, %234 : vector<1x64xf32>
    %236 = math.tanh %230 : vector<1x64xf32>
    %237 = vector.extract_strided_slice %235 {offsets = [0, 0], sizes = [1, 16], strides = [1, 1]} : vector<1x64xf32> to vector<1x16xf32>
    %238 = vector.extract_strided_slice %235 {offsets = [0, 16], sizes = [1, 16], strides = [1, 1]} : vector<1x64xf32> to vector<1x16xf32>
    %239 = vector.extract_strided_slice %236 {offsets = [0, 32], sizes = [1, 16], strides = [1, 1]} : vector<1x64xf32> to vector<1x16xf32>
    %240 = vector.extract_strided_slice %235 {offsets = [0, 48], sizes = [1, 16], strides = [1, 1]} : vector<1x64xf32> to vector<1x16xf32>
    %241 = arith.mulf %238, %204 : vector<1x16xf32>
    %242 = arith.mulf %237, %239 : vector<1x16xf32>
    %243 = arith.addf %241, %242 : vector<1x16xf32>
    %244 = math.tanh %243 : vector<1x16xf32>
    %245 = arith.mulf %240, %244 : vector<1x16xf32>
    %246 = arith.index_cast %c5_i32 : i32 to index
    %c0_52 = arith.constant 0 : index
    %247 = vector.load %arg10[%246, %c0_52] : memref<8x16xf32, #tpu.memory_space<vmem>>, vector<1x16xf32>
    tpu.vector_store %arg10[%246, %c0_52], %245 {strides = array<i32>} : memref<8x16xf32, #tpu.memory_space<vmem>>, vector<1x16xf32>,
    %c6_i32 = arith.constant 6 : i32
    %248 = arith.index_cast %c6_i32 : i32 to index
    %c0_53 = arith.constant 0 : index
    %249 = vector.load %arg9[%248, %c0_53] : memref<8x128xf32, #tpu.memory_space<vmem>>, vector<1x128xf32>
    %cst_54 = arith.constant dense<0.000000e+00> : vector<1x128xf32>
    %250 = tpu.matmul %227, %7, %cst_54 {dimension_numbers = #tpu.dot_dimension_numbers<[1], [0], [0], [1], [0, 0, 1, 1], [], []>} : vector<1x32xf32>, vector<32x128xf32>, vector<1x128xf32> -> vector<1x128xf32>
    %251 = arith.addf %249, %250 : vector<1x128xf32>
    %252 = arith.negf %251 : vector<1x128xf32>
    %253 = math.exp %252 : vector<1x128xf32>
    %cst_55 = arith.constant 1.000000e+00 : f32
    %254 = vector.broadcast %cst_55 : f32 to vector<1x128xf32>
    %255 = arith.addf %254, %253 : vector<1x128xf32>
    %256 = arith.divf %254, %255 : vector<1x128xf32>
    %257 = math.tanh %251 : vector<1x128xf32>
    %258 = vector.extract_strided_slice %256 {offsets = [0, 0], sizes = [1, 32], strides = [1, 1]} : vector<1x128xf32> to vector<1x32xf32>
    %259 = vector.extract_strided_slice %256 {offsets = [0, 32], sizes = [1, 32], strides = [1, 1]} : vector<1x128xf32> to vector<1x32xf32>
    %260 = vector.extract_strided_slice %257 {offsets = [0, 64], sizes = [1, 32], strides = [1, 1]} : vector<1x128xf32> to vector<1x32xf32>
    %261 = vector.extract_strided_slice %256 {offsets = [0, 96], sizes = [1, 32], strides = [1, 1]} : vector<1x128xf32> to vector<1x32xf32>
    %262 = arith.mulf %259, %225 : vector<1x32xf32>
    %263 = arith.mulf %258, %260 : vector<1x32xf32>
    %264 = arith.addf %262, %263 : vector<1x32xf32>
    %265 = math.tanh %264 : vector<1x32xf32>
    %266 = arith.mulf %261, %265 : vector<1x32xf32>
    %267 = tpu.concatenate %266, %245 in 1 : vector<1x32xf32>, vector<1x16xf32> -> vector<1x48xf32>
    %cst_56 = arith.constant dense<0.000000e+00> : vector<1x64xf32>
    %268 = tpu.matmul %267, %8, %cst_56 {dimension_numbers = #tpu.dot_dimension_numbers<[1], [0], [0], [1], [0, 0, 1, 1], [], []>} : vector<1x48xf32>, vector<48x64xf32>, vector<1x64xf32> -> vector<1x64xf32>
    %269 = arith.addf %268, %9 : vector<1x64xf32>
    %270 = arith.negf %269 : vector<1x64xf32>
    %271 = math.exp %270 : vector<1x64xf32>
    %cst_57 = arith.constant 1.000000e+00 : f32
    %272 = vector.broadcast %cst_57 : f32 to vector<1x64xf32>
    %273 = arith.addf %272, %271 : vector<1x64xf32>
    %274 = arith.divf %272, %273 : vector<1x64xf32>
    %275 = math.tanh %269 : vector<1x64xf32>
    %276 = vector.extract_strided_slice %274 {offsets = [0, 0], sizes = [1, 16], strides = [1, 1]} : vector<1x64xf32> to vector<1x16xf32>
    %277 = vector.extract_strided_slice %274 {offsets = [0, 16], sizes = [1, 16], strides = [1, 1]} : vector<1x64xf32> to vector<1x16xf32>
    %278 = vector.extract_strided_slice %275 {offsets = [0, 32], sizes = [1, 16], strides = [1, 1]} : vector<1x64xf32> to vector<1x16xf32>
    %279 = vector.extract_strided_slice %274 {offsets = [0, 48], sizes = [1, 16], strides = [1, 1]} : vector<1x64xf32> to vector<1x16xf32>
    %280 = arith.mulf %277, %243 : vector<1x16xf32>
    %281 = arith.mulf %276, %278 : vector<1x16xf32>
    %282 = arith.addf %280, %281 : vector<1x16xf32>
    %283 = math.tanh %282 : vector<1x16xf32>
    %284 = arith.mulf %279, %283 : vector<1x16xf32>
    %285 = arith.index_cast %c6_i32 : i32 to index
    %c0_58 = arith.constant 0 : index
    %286 = vector.load %arg10[%285, %c0_58] : memref<8x16xf32, #tpu.memory_space<vmem>>, vector<1x16xf32>
    tpu.vector_store %arg10[%285, %c0_58], %284 {strides = array<i32>} : memref<8x16xf32, #tpu.memory_space<vmem>>, vector<1x16xf32>,
    %c7_i32 = arith.constant 7 : i32
    %287 = arith.index_cast %c7_i32 : i32 to index
    %c0_59 = arith.constant 0 : index
    %288 = vector.load %arg9[%287, %c0_59] : memref<8x128xf32, #tpu.memory_space<vmem>>, vector<1x128xf32>
    %cst_60 = arith.constant dense<0.000000e+00> : vector<1x128xf32>
    %289 = tpu.matmul %266, %7, %cst_60 {dimension_numbers = #tpu.dot_dimension_numbers<[1], [0], [0], [1], [0, 0, 1, 1], [], []>} : vector<1x32xf32>, vector<32x128xf32>, vector<1x128xf32> -> vector<1x128xf32>
    %290 = arith.addf %288, %289 : vector<1x128xf32>
    %291 = arith.negf %290 : vector<1x128xf32>
    %292 = math.exp %291 : vector<1x128xf32>
    %cst_61 = arith.constant 1.000000e+00 : f32
    %293 = vector.broadcast %cst_61 : f32 to vector<1x128xf32>
    %294 = arith.addf %293, %292 : vector<1x128xf32>
    %295 = arith.divf %293, %294 : vector<1x128xf32>
    %296 = math.tanh %290 : vector<1x128xf32>
    %297 = vector.extract_strided_slice %295 {offsets = [0, 0], sizes = [1, 32], strides = [1, 1]} : vector<1x128xf32> to vector<1x32xf32>
    %298 = vector.extract_strided_slice %295 {offsets = [0, 32], sizes = [1, 32], strides = [1, 1]} : vector<1x128xf32> to vector<1x32xf32>
    %299 = vector.extract_strided_slice %296 {offsets = [0, 64], sizes = [1, 32], strides = [1, 1]} : vector<1x128xf32> to vector<1x32xf32>
    %300 = vector.extract_strided_slice %295 {offsets = [0, 96], sizes = [1, 32], strides = [1, 1]} : vector<1x128xf32> to vector<1x32xf32>
    %301 = arith.mulf %298, %264 : vector<1x32xf32>
    %302 = arith.mulf %297, %299 : vector<1x32xf32>
    %303 = arith.addf %301, %302 : vector<1x32xf32>
    %304 = math.tanh %303 : vector<1x32xf32>
    %305 = arith.mulf %300, %304 : vector<1x32xf32>
    %306 = tpu.concatenate %305, %284 in 1 : vector<1x32xf32>, vector<1x16xf32> -> vector<1x48xf32>
    %cst_62 = arith.constant dense<0.000000e+00> : vector<1x64xf32>
    %307 = tpu.matmul %306, %8, %cst_62 {dimension_numbers = #tpu.dot_dimension_numbers<[1], [0], [0], [1], [0, 0, 1, 1], [], []>} : vector<1x48xf32>, vector<48x64xf32>, vector<1x64xf32> -> vector<1x64xf32>
    %308 = arith.addf %307, %9 : vector<1x64xf32>
    %309 = arith.negf %308 : vector<1x64xf32>
    %310 = math.exp %309 : vector<1x64xf32>
    %cst_63 = arith.constant 1.000000e+00 : f32
    %311 = vector.broadcast %cst_63 : f32 to vector<1x64xf32>
    %312 = arith.addf %311, %310 : vector<1x64xf32>
    %313 = arith.divf %311, %312 : vector<1x64xf32>
    %314 = math.tanh %308 : vector<1x64xf32>
    %315 = vector.extract_strided_slice %313 {offsets = [0, 0], sizes = [1, 16], strides = [1, 1]} : vector<1x64xf32> to vector<1x16xf32>
    %316 = vector.extract_strided_slice %313 {offsets = [0, 16], sizes = [1, 16], strides = [1, 1]} : vector<1x64xf32> to vector<1x16xf32>
    %317 = vector.extract_strided_slice %314 {offsets = [0, 32], sizes = [1, 16], strides = [1, 1]} : vector<1x64xf32> to vector<1x16xf32>
    %318 = vector.extract_strided_slice %313 {offsets = [0, 48], sizes = [1, 16], strides = [1, 1]} : vector<1x64xf32> to vector<1x16xf32>
    %319 = arith.mulf %316, %282 : vector<1x16xf32>
    %320 = arith.mulf %315, %317 : vector<1x16xf32>
    %321 = arith.addf %319, %320 : vector<1x16xf32>
    %322 = math.tanh %321 : vector<1x16xf32>
    %323 = arith.mulf %318, %322 : vector<1x16xf32>
    %324 = arith.index_cast %c7_i32 : i32 to index
    %c0_64 = arith.constant 0 : index
    %325 = vector.load %arg10[%324, %c0_64] : memref<8x16xf32, #tpu.memory_space<vmem>>, vector<1x16xf32>
    tpu.vector_store %arg10[%324, %c0_64], %323 {strides = array<i32>} : memref<8x16xf32, #tpu.memory_space<vmem>>, vector<1x16xf32>,
    %c8_i32 = arith.constant 8 : i32
    %c0_65 = arith.constant 0 : index
    %c0_66 = arith.constant 0 : index
    %326 = vector.load %arg10[%c0_65, %c0_66] : memref<8x16xf32, #tpu.memory_space<vmem>>, vector<8x16xf32>
    %c0_67 = arith.constant 0 : index
    %c0_68 = arith.constant 0 : index
    %327 = vector.load %arg6[%c0_67, %c0_68] : memref<16x1xf32, #tpu.memory_space<vmem>>, vector<16x1xf32>
    %cst_69 = arith.constant dense<0.000000e+00> : vector<8x1xf32>
    %328 = tpu.matmul %326, %327, %cst_69 {dimension_numbers = #tpu.dot_dimension_numbers<[1], [0], [0], [1], [0, 0, 1, 1], [], []>} : vector<8x16xf32>, vector<16x1xf32>, vector<8x1xf32> -> vector<8x1xf32>
    %c0_70 = arith.constant 0 : index
    %c0_71 = arith.constant 0 : index
    %329 = vector.load %arg7[%c0_70, %c0_71] : memref<1x1xf32, #tpu.memory_space<vmem>>, vector<1x1xf32>
    %330 = vector.broadcast %329 : vector<1x1xf32> to vector<8x1xf32>
    %331 = arith.addf %328, %330 : vector<8x1xf32>
    %c0_72 = arith.constant 0 : index
    %c0_73 = arith.constant 0 : index
    %332 = vector.load %arg8[%c0_72, %c0_73] : memref<8x1xf32, #tpu.memory_space<vmem>>, vector<8x1xf32>
    tpu.vector_store %arg8[%c0_72, %c0_73], %331 {strides = array<i32>} : memref<8x1xf32, #tpu.memory_space<vmem>>, vector<8x1xf32>,
    return
  }
}

</mosaic_0001>

<llo_original>
// kernel: tpu_custom_call.1
$region0: #{tpu_custom_call.1}
  #allocation0 [shape = 'u32[]', space=smem, size = 0x4, offset = 0x4, fixed_abs, tag = 'smem constant byte address 0x4 - core index']
  #allocation1 [shape = 'u32[144,128]{1,0:T(1,128)}', space=vmem, size = 0x12000, scoped, tag = 'internal scratch']
  #allocation2 [shape = 'f32[8,128]{1,0:T(8,128)}', space=vmem, size = 0x1000, scoped, tag = 'scratch operand']
  #allocation3 [shape = 'f32[8,16]{1,0:T(8,128)}', space=vmem, size = 0x1000, scoped, tag = 'scratch operand']
  #allocation4 [shape = 'f32[1,1]{1,0:T(1,128)S(1)}', space=vmem, size = 0x200, scoped, tag = 'scoped memory for tpu_custom_call.1']
  %s0 = inlined_call_operand.vmem [shape: f32[8,4], index: 0, kind: input, shape index: {}]
  %s1 = inlined_call_operand.vmem [shape: f32[4,128], index: 1, kind: input, shape index: {}]
  %s2 = inlined_call_operand.vmem [shape: f32[32,128], index: 2, kind: input, shape index: {}]
  %s3 = inlined_call_operand.vmem [shape: f32[1,128], index: 3, kind: input, shape index: {}]
  %s4 = inlined_call_operand.hbm [shape: f32[48,64], index: 4, kind: input, shape index: {}]
  %s5 = inlined_call_operand.vmem [shape: f32[1,64], index: 5, kind: input, shape index: {}]
  %s6 = inlined_call_operand.vmem [shape: f32[16,1], index: 6, kind: input, shape index: {}]
  %s7 = inlined_call_operand.<no memory space> [shape: f32[1,1], index: 7, kind: input, shape index: {}]
  %s8 = inlined_call_operand.vmem [shape: f32[8,1], index: 8, kind: output, shape index: {}]
  %s9 = sld [smem:[#allocation0]]
  $region46: #{tpu_custom_call.1} parent=0
    _
  %s11 = ssub.s32 1, %s9
  %s12 = scalar_select 0, %s11, %s9
  %v13 = vstv %s7
  %14 = vst [vmem:[#allocation4] sm:$0x1] %v13
  $region1: #{tpu_custom_call.1} parent=0
    #allocation5 [shape = 'u8[24576]{0}', space=vmem, size = 0x6000, scoped, tag = 'input window, operand 4, single buffered']
    #allocation6 [shape = 's32[1]{0}', space=sflag, size = 0x4, scoped, tag = 'scoped memory for tpu_custom_call.1']
    %15 = vsyncpa [#allocation6], 0
    // Predicated region
    $region2: #{tpu_custom_call.1} parent=1 // pred_check
      _
    $region3: #{tpu_custom_call.1} parent=1 // pred_check_branch
      %17 = sbr.rel (0) target = $region5
    $region4: #{tpu_custom_call.1} parent=1 // pred_region
      _
    $region5: #{tpu_custom_call.1} parent=1 // pred_fallthru
      _
    // Predicated region
    $region6: #{tpu_custom_call.1} parent=1 // pred_check
      _
    $region7: #{tpu_custom_call.1} parent=1 // pred_check_branch
      %19 = sbr.rel (0) target = $region9
    $region8: #{tpu_custom_call.1} parent=1 // pred_region
      _
    $region9: #{tpu_custom_call.1} parent=1 // pred_fallthru
      _
    // Predicated region
    $region10: #{tpu_custom_call.1} parent=1 // pred_check
      _
    $region11: #{tpu_custom_call.1} parent=1 // pred_check_branch
      %21 = sbr.rel (0) target = $region13
    $region12: #{tpu_custom_call.1} parent=1 // pred_region
      _
    $region13: #{tpu_custom_call.1} parent=1 // pred_fallthru
      _
    // Predicated region
    $region14: #{tpu_custom_call.1} parent=1 // pred_check
      _
    $region15: #{tpu_custom_call.1} parent=1 // pred_check_branch
      %23 = sbr.rel (0) target = $region17
    $region16: #{tpu_custom_call.1} parent=1 // pred_region
      _
    $region17: #{tpu_custom_call.1} parent=1 // pred_fallthru
      _
    // Predicated region
    $region18: #{tpu_custom_call.1} parent=1 // pred_check
      _
    $region19: #{tpu_custom_call.1} parent=1 // pred_check_branch
      %25 = sbr.rel (0) target = $region21
    $region20: #{tpu_custom_call.1} parent=1 // pred_region
      %s27 = ssub.s32 768, 768
      %28 = vsyncadd [#allocation6], %s27
      %s29 = sshll.u32 [#allocation5], 4
      %s30 = int_to_ptr.vmem [resolvable:$true] %s29
      %35 = dma.hbm_to_vmem [thread:$0]  %s4, 768, %s30, [#allocation6], 128, 128, 8
    $region21: #{tpu_custom_call.1} parent=1 // pred_fallthru
      _
    // Predicated region
    $region22: #{tpu_custom_call.1} parent=1 // pred_check
      _
    $region23: #{tpu_custom_call.1} parent=1 // pred_check_branch
      %37 = sbr.rel (0) target = $region25
    $region24: #{tpu_custom_call.1} parent=1 // pred_region
      _
    $region25: #{tpu_custom_call.1} parent=1 // pred_fallthru
      _
    // Predicated region
    $region26: #{tpu_custom_call.1} parent=1 // pred_check
      _
    $region27: #{tpu_custom_call.1} parent=1 // pred_check_branch
      %39 = sbr.rel (0) target = $region29
    $region28: #{tpu_custom_call.1} parent=1 // pred_region
      _
    $region29: #{tpu_custom_call.1} parent=1 // pred_fallthru
      _
    // Predicated region
    $region30: #{tpu_custom_call.1} parent=1 // pred_check
      _
    $region31: #{tpu_custom_call.1} parent=1 // pred_check_branch
      %41 = sbr.rel (0) target = $region33
    $region32: #{tpu_custom_call.1} parent=1 // pred_region
      _
    $region33: #{tpu_custom_call.1} parent=1 // pred_fallthru
      _
    // Predicated region
    $region34: #{tpu_custom_call.1} parent=1 // pred_check
      _
    $region35: #{tpu_custom_call.1} parent=1 // pred_check_branch
      %43 = sbr.rel (0) target = $region37
    $region36: #{tpu_custom_call.1} parent=1 // pred_region
      %44 = dma.done [#allocation6], 768
    $region37: #{tpu_custom_call.1} parent=1 // pred_fallthru
      _
    %v45 = vld [vmem:[%s0] sm:$0xff]
    %v46 = vld [vmem:[%s1] sm:$0xf]
    %v47 = vld [vmem:[%s3] sm:$0x1]
    %v49 = vlaneseq
    %v50 = vshrl.u32 %v49, 7
    %v51 = vsub.s32 0, %v50
    %v52 = vrot.slane %v47, %v51
    %vm54 = vcmask 31744
    %v56 = vsel %vm54, %v45, 0
    %vm58 = vcmask 1043456
    %v60 = vsel %vm58, %v46, 0
    %62 = vmatprep.subr.mxu0 0.0
    %63 = vmatpush1.msra.mxu0 %v60
    %64 = vmatprep.subr.mxu0 0.0
    %65 = vmatpush1.msra.mxu0 0.0
    %66 = vmatprep.subr.mxu0 0.0
    %67 = vmatpush1.msra.mxu0 0.0
    %68 = vmatprep.subr.mxu0 0.0
    %69 = vmatpush1.msra.mxu0 0.0
    %70 = vmatprep.subr.mxu0 0.0
    %71 = vmatpush1.msra.mxu0 0.0
    %72 = vmatprep.subr.mxu0 0.0
    %73 = vmatpush1.msra.mxu0 0.0
    %74 = vmatprep.subr.mxu0 0.0
    %75 = vmatpush1.msra.mxu0 0.0
    %76 = vmatprep.subr.mxu0 0.0
    %77 = vmatpush1.msra.mxu0 0.0
    %78 = vmatprep.subr.mxu0 0.0
    %79 = vmatpush1.msra.mxu0 0.0
    %80 = vmatprep.subr.mxu0 0.0
    %81 = vmatpush1.msra.mxu0 0.0
    %82 = vmatprep.subr.mxu0 0.0
    %83 = vmatpush1.msra.mxu0 0.0
    %84 = vmatprep.subr.mxu0 0.0
    %85 = vmatpush1.msra.mxu0 0.0
    %86 = vmatprep.subr.mxu0 0.0
    %87 = vmatpush1.msra.mxu0 0.0
    %88 = vmatprep.subr.mxu0 0.0
    %89 = vmatpush1.msra.mxu0 0.0
    %90 = vmatprep.subr.mxu0 0.0
    %91 = vmatpush1.msra.mxu0 0.0
    %92 = vmatprep.subr.mxu0 0.0
    %93 = vmatpush1.msra.mxu0 0.0
    %94 = vmatprep.subr.mxu0 0.0
    %95 = vmatpush1.msra.mxu0 0.0
    %96 = vmatprep.subr.mxu0 0.0
    %97 = vmatpush1.msra.mxu0 0.0
    %98 = vmatprep.subr.mxu0 0.0
    %99 = vmatpush1.msra.mxu0 0.0
    %100 = vmatprep.subr.mxu0 0.0
    %101 = vmatpush1.msra.mxu0 0.0
    %102 = vmatprep.subr.mxu0 0.0
    %103 = vmatpush1.msra.mxu0 0.0
    %104 = vmatprep.subr.mxu0 0.0
    %105 = vmatpush1.msra.mxu0 0.0
    %106 = vmatprep.subr.mxu0 0.0
    %107 = vmatpush1.msra.mxu0 0.0
    %108 = vmatprep.subr.mxu0 0.0
    %109 = vmatpush1.msra.mxu0 0.0
    %110 = vmatprep.subr.mxu0 0.0
    %111 = vmatpush1.msra.mxu0 0.0
    %112 = vmatprep.subr.mxu0 0.0
    %113 = vmatpush1.msra.mxu0 0.0
    %114 = vmatprep.subr.mxu0 0.0
    %115 = vmatpush1.msra.mxu0 0.0
    %116 = vmatprep.subr.mxu0 0.0
    %117 = vmatpush1.msra.mxu0 0.0
    %118 = vmatprep.subr.mxu0 0.0
    %119 = vmatpush1.msra.mxu0 0.0
    %120 = vmatprep.subr.mxu0 0.0
    %121 = vmatpush1.msra.mxu0 0.0
    %122 = vmatprep.subr.mxu0 0.0
    %123 = vmatpush1.msra.mxu0 0.0
    %124 = vmatprep.subr.mxu0 0.0
    %125 = vmatpush1.msra.mxu0 0.0
    %126 = vmatprep.mubr.f32.mxu0 0.0
    %127 = vmatmul.mubr.f32.gmra.mrb[0].mxu0 %v56
    %v128 = vpop.f32.mrb[0].mxu0
    %v129 = vadd.f32 %v52, %v128
    %v130 = vpop.f32.mrb[0].mxu0
    %131 = vdwg.mxu0
    %132 = vst [vmem:[#allocation2] sm:$0xff] %v129
    %v133 = vld [vmem:[%s2] sm:$0xff]
    %v134 = vld [vmem:[%s2 + $0x8] sm:$0xff]
    %v135 = vld [vmem:[%s2 + $0x10] sm:$0xff]
    %v136 = vld [vmem:[%s2 + $0x18] sm:$0xff]
    %v137 = vld [vmem:[#allocation5] sm:$0xff]
    %v138 = vld [vmem:[#allocation5 + $0x8] sm:$0xff]
    %v139 = vld [vmem:[#allocation5 + $0x10] sm:$0xff]
    %v140 = vld [vmem:[#allocation5 + $0x18] sm:$0xff]
    %v141 = vld [vmem:[#allocation5 + $0x20] sm:$0xff]
    %v142 = vld [vmem:[#allocation5 + $0x28] sm:$0xff]
    %v143 = vld [vmem:[%s5] sm:$0x1]
    %v144 = vld [vmem:[#allocation2] sm:$0x1]
    %vm145 = vcmask 261120
    %v147 = vsel %vm145, 0.0, 0
    %149 = vmatprep.subr.mxu0 0.0
    %150 = vmatpush1.msra.mxu0 %v133
    %151 = vmatprep.subr.mxu0 0.0
    %152 = vmatpush1.msra.mxu0 %v134
    %153 = vmatprep.subr.mxu0 0.0
    %154 = vmatpush1.msra.mxu0 %v135
    %155 = vmatprep.subr.mxu0 0.0
    %156 = vmatpush1.msra.mxu0 %v136
    %157 = vmatprep.subr.mxu0 0.0
    %158 = vmatpush1.msra.mxu0 0.0
    %159 = vmatprep.subr.mxu0 0.0
    %160 = vmatpush1.msra.mxu0 0.0
    %161 = vmatprep.subr.mxu0 0.0
    %162 = vmatpush1.msra.mxu0 0.0
    %163 = vmatprep.subr.mxu0 0.0
    %164 = vmatpush1.msra.mxu0 0.0
    %165 = vmatprep.subr.mxu0 0.0
    %166 = vmatpush1.msra.mxu0 0.0
    %167 = vmatprep.subr.mxu0 0.0
    %168 = vmatpush1.msra.mxu0 0.0
    %169 = vmatprep.subr.mxu0 0.0
    %170 = vmatpush1.msra.mxu0 0.0
    %171 = vmatprep.subr.mxu0 0.0
    %172 = vmatpush1.msra.mxu0 0.0
    %173 = vmatprep.subr.mxu0 0.0
    %174 = vmatpush1.msra.mxu0 0.0
    %175 = vmatprep.subr.mxu0 0.0
    %176 = vmatpush1.msra.mxu0 0.0
    %177 = vmatprep.subr.mxu0 0.0
    %178 = vmatpush1.msra.mxu0 0.0
    %179 = vmatprep.subr.mxu0 0.0
    %180 = vmatpush1.msra.mxu0 0.0
    %181 = vmatprep.subr.mxu0 0.0
    %182 = vmatpush1.msra.mxu0 0.0
    %183 = vmatprep.subr.mxu0 0.0
    %184 = vmatpush1.msra.mxu0 0.0
    %185 = vmatprep.subr.mxu0 0.0
    %186 = vmatpush1.msra.mxu0 0.0
    %187 = vmatprep.subr.mxu0 0.0
    %188 = vmatpush1.msra.mxu0 0.0
    %189 = vmatprep.subr.mxu0 0.0
    %190 = vmatpush1.msra.mxu0 0.0
    %191 = vmatprep.subr.mxu0 0.0
    %192 = vmatpush1.msra.mxu0 0.0
    %193 = vmatprep.subr.mxu0 0.0
    %194 = vmatpush1.msra.mxu0 0.0
    %195 = vmatprep.subr.mxu0 0.0
    %196 = vmatpush1.msra.mxu0 0.0
    %197 = vmatprep.subr.mxu0 0.0
    %198 = vmatpush1.msra.mxu0 0.0
    %199 = vmatprep.subr.mxu0 0.0
    %200 = vmatpush1.msra.mxu0 0.0
    %201 = vmatprep.subr.mxu0 0.0
    %202 = vmatpush1.msra.mxu0 0.0
    %203 = vmatprep.subr.mxu0 0.0
    %204 = vmatpush1.msra.mxu0 0.0
    %205 = vmatprep.subr.mxu0 0.0
    %206 = vmatpush1.msra.mxu0 0.0
    %207 = vmatprep.subr.mxu0 0.0
    %208 = vmatpush1.msra.mxu0 0.0
    %209 = vmatprep.subr.mxu0 0.0
    %210 = vmatpush1.msra.mxu0 0.0
    %211 = vmatprep.subr.mxu0 0.0
    %212 = vmatpush1.msra.mxu0 0.0
    %213 = vmatprep.mubr.f32.mxu0 0.0
    %214 = vmatmul.mubr.f32.gmra.mrb[0].mxu0 %v147
    %v215 = vpop.f32.mrb[0].mxu0
    %v216 = vadd.f32 0.0, %v215
    %v217 = vpop.f32.mrb[0].mxu0
    %218 = vdwg.mxu0
    %v219 = vadd.f32 %v144, %v216
    %v220 = vxor.u32 %v219, 2147483648
    %v221 = vmul.f32 %v220, 1.442695
    %v222 = vpow.pop %v221
    %v223 = vadd.f32 %v222, 1.0
    %v224 = vrcp.pop %v223
    %v225 = vmul.f32 1.0, %v224
    %v226 = vtanh.pop %v219
    %v227 = vmul.f32 %v225, 0.0
    %229 = vrot.lane.b32.xlu0 %v226, 64
    %v230 = vpop.permute.xlu0 %229
    %v232 = vmul.f32 %v225, %v230
    %234 = vrot.lane.b32.xlu0 %v232, 32
    %v235 = vpop.permute.xlu0 %234
    %v237 = vadd.f32 %v227, %v235
    %v238 = vtanh.pop %v237
    %240 = vrot.lane.b32.xlu0 %v238, 64
    %v241 = vpop.permute.xlu0 %240
    %v243 = vmul.f32 %v225, %v241
    %245 = vrot.lane.b32.xlu0 %v243, 32
    %v246 = vpop.permute.xlu0 %245
    %v248 = vsel %vm145, %v246, 0.0
    %vm249 = vcmask 392192
    %v251 = vsel %vm249, %v248, 0
    %253 = vmatprep.subr.mxu0 0.0
    %254 = vmatpush1.msra.mxu0 %v137
    %255 = vmatprep.subr.mxu0 0.0
    %256 = vmatpush1.msra.mxu0 %v138
    %257 = vmatprep.subr.mxu0 0.0
    %258 = vmatpush1.msra.mxu0 %v139
    %259 = vmatprep.subr.mxu0 0.0
    %260 = vmatpush1.msra.mxu0 %v140
    %261 = vmatprep.subr.mxu0 0.0
    %262 = vmatpush1.msra.mxu0 %v141
    %263 = vmatprep.subr.mxu0 0.0
    %264 = vmatpush1.msra.mxu0 %v142
    %265 = vmatprep.subr.mxu0 0.0
    %266 = vmatpush1.msra.mxu0 0.0
    %267 = vmatprep.subr.mxu0 0.0
    %268 = vmatpush1.msra.mxu0 0.0
    %269 = vmatprep.subr.mxu0 0.0
    %270 = vmatpush1.msra.mxu0 0.0
    %271 = vmatprep.subr.mxu0 0.0
    %272 = vmatpush1.msra.mxu0 0.0
    %273 = vmatprep.subr.mxu0 0.0
    %274 = vmatpush1.msra.mxu0 0.0
    %275 = vmatprep.subr.mxu0 0.0
    %276 = vmatpush1.msra.mxu0 0.0
    %277 = vmatprep.subr.mxu0 0.0
    %278 = vmatpush1.msra.mxu0 0.0
    %279 = vmatprep.subr.mxu0 0.0
    %280 = vmatpush1.msra.mxu0 0.0
    %281 = vmatprep.subr.mxu0 0.0
    %282 = vmatpush1.msra.mxu0 0.0
    %283 = vmatprep.subr.mxu0 0.0
    %284 = vmatpush1.msra.mxu0 0.0
    %285 = vmatprep.subr.mxu0 0.0
    %286 = vmatpush1.msra.mxu0 0.0
    %287 = vmatprep.subr.mxu0 0.0
    %288 = vmatpush1.msra.mxu0 0.0
    %289 = vmatprep.subr.mxu0 0.0
    %290 = vmatpush1.msra.mxu0 0.0
    %291 = vmatprep.subr.mxu0 0.0
    %292 = vmatpush1.msra.mxu0 0.0
    %293 = vmatprep.subr.mxu0 0.0
    %294 = vmatpush1.msra.mxu0 0.0
    %295 = vmatprep.subr.mxu0 0.0
    %296 = vmatpush1.msra.mxu0 0.0
    %297 = vmatprep.subr.mxu0 0.0
    %298 = vmatpush1.msra.mxu0 0.0
    %299 = vmatprep.subr.mxu0 0.0
    %300 = vmatpush1.msra.mxu0 0.0
    %301 = vmatprep.subr.mxu0 0.0
    %302 = vmatpush1.msra.mxu0 0.0
    %303 = vmatprep.subr.mxu0 0.0
    %304 = vmatpush1.msra.mxu0 0.0
    %305 = vmatprep.subr.mxu0 0.0
    %306 = vmatpush1.msra.mxu0 0.0
    %307 = vmatprep.subr.mxu0 0.0
    %308 = vmatpush1.msra.mxu0 0.0
    %309 = vmatprep.subr.mxu0 0.0
    %310 = vmatpush1.msra.mxu0 0.0
    %311 = vmatprep.subr.mxu0 0.0
    %312 = vmatpush1.msra.mxu0 0.0
    %313 = vmatprep.subr.mxu0 0.0
    %314 = vmatpush1.msra.mxu0 0.0
    %315 = vmatprep.subr.mxu0 0.0
    %316 = vmatpush1.msra.mxu0 0.0
    %317 = vmatprep.mubr.f32.mxu0 0.0
    %318 = vmatmul.mubr.f32.gmra.mrb[0].mxu0 %v251
    %v319 = vpop.f32.mrb[0].mxu0
    %v320 = vadd.f32 %v143, %v319
    %v321 = vpop.f32.mrb[0].mxu0
    %322 = vdwg.mxu0
    %v323 = vxor.u32 %v320, 2147483648
    %v324 = vmul.f32 %v323, 1.442695
    %v325 = vpow.pop %v324
    %v326 = vadd.f32 %v325, 1.0
    %v327 = vrcp.pop %v326
    %v328 = vmul.f32 1.0, %v327
    %v329 = vtanh.pop %v320
    %v330 = vmul.f32 %v328, 0.0
    %332 = vrot.lane.b32.xlu0 %v329, 96
    %v333 = vpop.permute.xlu0 %332
    %v335 = vmul.f32 %v328, %v333
    %337 = vrot.lane.b32.xlu0 %v335, 16
    %v338 = vpop.permute.xlu0 %337
    %v340 = vadd.f32 %v330, %v338
    %v341 = vtanh.pop %v340
    %343 = vrot.lane.b32.xlu0 %v341, 32
    %v344 = vpop.permute.xlu0 %343
    %v346 = vmul.f32 %v328, %v344
    %348 = vrot.lane.b32.xlu0 %v346, 80
    %v349 = vpop.permute.xlu0 %348
    %vm351 = vcmask 122880
    %352 = vst.msk [vmem:[#allocation3] sm:$0x1] %vm351, %v349
    %v353 = vld [vmem:[#allocation2 + $0x1] sm:$0x1]
    %v354 = vsel %vm145, %v246, 0
    %356 = vmatprep.subr.mxu0 0.0
    %357 = vmatpush1.msra.mxu0 %v133
    %358 = vmatprep.subr.mxu0 0.0
    %359 = vmatpush1.msra.mxu0 %v134
    %360 = vmatprep.subr.mxu0 0.0
    %361 = vmatpush1.msra.mxu0 %v135
    %362 = vmatprep.subr.mxu0 0.0
    %363 = vmatpush1.msra.mxu0 %v136
    %364 = vmatprep.subr.mxu0 0.0
    %365 = vmatpush1.msra.mxu0 0.0
    %366 = vmatprep.subr.mxu0 0.0
    %367 = vmatpush1.msra.mxu0 0.0
    %368 = vmatprep.subr.mxu0 0.0
    %369 = vmatpush1.msra.mxu0 0.0
    %370 = vmatprep.subr.mxu0 0.0
    %371 = vmatpush1.msra.mxu0 0.0
    %372 = vmatprep.subr.mxu0 0.0
    %373 = vmatpush1.msra.mxu0 0.0
    %374 = vmatprep.subr.mxu0 0.0
    %375 = vmatpush1.msra.mxu0 0.0
    %376 = vmatprep.subr.mxu0 0.0
    %377 = vmatpush1.msra.mxu0 0.0
    %378 = vmatprep.subr.mxu0 0.0
    %379 = vmatpush1.msra.mxu0 0.0
    %380 = vmatprep.subr.mxu0 0.0
    %381 = vmatpush1.msra.mxu0 0.0
    %382 = vmatprep.subr.mxu0 0.0
    %383 = vmatpush1.msra.mxu0 0.0
    %384 = vmatprep.subr.mxu0 0.0
    %385 = vmatpush1.msra.mxu0 0.0
    %386 = vmatprep.subr.mxu0 0.0
    %387 = vmatpush1.msra.mxu0 0.0
    %388 = vmatprep.subr.mxu0 0.0
    %389 = vmatpush1.msra.mxu0 0.0
    %390 = vmatprep.subr.mxu0 0.0
    %391 = vmatpush1.msra.mxu0 0.0
    %392 = vmatprep.subr.mxu0 0.0
    %393 = vmatpush1.msra.mxu0 0.0
    %394 = vmatprep.subr.mxu0 0.0
    %395 = vmatpush1.msra.mxu0 0.0
    %396 = vmatprep.subr.mxu0 0.0
    %397 = vmatpush1.msra.mxu0 0.0
    %398 = vmatprep.subr.mxu0 0.0
    %399 = vmatpush1.msra.mxu0 0.0
    %400 = vmatprep.subr.mxu0 0.0
    %401 = vmatpush1.msra.mxu0 0.0
    %402 = vmatprep.subr.mxu0 0.0
    %403 = vmatpush1.msra.mxu0 0.0
    %404 = vmatprep.subr.mxu0 0.0
    %405 = vmatpush1.msra.mxu0 0.0
    %406 = vmatprep.subr.mxu0 0.0
    %407 = vmatpush1.msra.mxu0 0.0
    %408 = vmatprep.subr.mxu0 0.0
    %409 = vmatpush1.msra.mxu0 0.0
    %410 = vmatprep.subr.mxu0 0.0
    %411 = vmatpush1.msra.mxu0 0.0
    %412 = vmatprep.subr.mxu0 0.0
    %413 = vmatpush1.msra.mxu0 0.0
    %414 = vmatprep.subr.mxu0 0.0
    %415 = vmatpush1.msra.mxu0 0.0
    %416 = vmatprep.subr.mxu0 0.0
    %417 = vmatpush1.msra.mxu0 0.0
    %418 = vmatprep.subr.mxu0 0.0
    %419 = vmatpush1.msra.mxu0 0.0
    %420 = vmatprep.mubr.f32.mxu0 0.0
    %421 = vmatmul.mubr.f32.gmra.mrb[0].mxu0 %v354
    %v422 = vpop.f32.mrb[0].mxu0
    %v423 = vadd.f32 0.0, %v422
    %v424 = vpop.f32.mrb[0].mxu0
    %425 = vdwg.mxu0
    %v426 = vadd.f32 %v353, %v423
    %v427 = vxor.u32 %v426, 2147483648
    %v428 = vmul.f32 %v427, 1.442695
    %v429 = vpow.pop %v428
    %v430 = vadd.f32 %v429, 1.0
    %v431 = vrcp.pop %v430
    %v432 = vmul.f32 1.0, %v431
    %v433 = vtanh.pop %v426
    %v434 = vmul.f32 %v432, %v237
    %436 = vrot.lane.b32.xlu0 %v433, 64
    %v437 = vpop.permute.xlu0 %436
    %v439 = vmul.f32 %v432, %v437
    %441 = vrot.lane.b32.xlu0 %v439, 32
    %v442 = vpop.permute.xlu0 %441
    %v444 = vadd.f32 %v434, %v442
    %v445 = vtanh.pop %v444
    %447 = vrot.lane.b32.xlu0 %v445, 64
    %v448 = vpop.permute.xlu0 %447
    %v450 = vmul.f32 %v432, %v448
    %452 = vrot.lane.b32.xlu0 %v450, 32
    %v453 = vpop.permute.xlu0 %452
    %455 = vrot.lane.b32.xlu0 %v346, 112
    %v456 = vpop.permute.xlu0 %455
    %v458 = vsel %vm145, %v453, %v456
    %v460 = vsel %vm249, %v458, 0
    %462 = vmatprep.subr.mxu0 0.0
    %463 = vmatpush1.msra.mxu0 %v137
    %464 = vmatprep.subr.mxu0 0.0
    %465 = vmatpush1.msra.mxu0 %v138
    %466 = vmatprep.subr.mxu0 0.0
    %467 = vmatpush1.msra.mxu0 %v139
    %468 = vmatprep.subr.mxu0 0.0
    %469 = vmatpush1.msra.mxu0 %v140
    %470 = vmatprep.subr.mxu0 0.0
    %471 = vmatpush1.msra.mxu0 %v141
    %472 = vmatprep.subr.mxu0 0.0
    %473 = vmatpush1.msra.mxu0 %v142
    %474 = vmatprep.subr.mxu0 0.0
    %475 = vmatpush1.msra.mxu0 0.0
    %476 = vmatprep.subr.mxu0 0.0
    %477 = vmatpush1.msra.mxu0 0.0
    %478 = vmatprep.subr.mxu0 0.0
    %479 = vmatpush1.msra.mxu0 0.0
    %480 = vmatprep.subr.mxu0 0.0
    %481 = vmatpush1.msra.mxu0 0.0
    %482 = vmatprep.subr.mxu0 0.0
    %483 = vmatpush1.msra.mxu0 0.0
    %484 = vmatprep.subr.mxu0 0.0
    %485 = vmatpush1.msra.mxu0 0.0
    %486 = vmatprep.subr.mxu0 0.0
    %487 = vmatpush1.msra.mxu0 0.0
    %488 = vmatprep.subr.mxu0 0.0
    %489 = vmatpush1.msra.mxu0 0.0
    %490 = vmatprep.subr.mxu0 0.0
    %491 = vmatpush1.msra.mxu0 0.0
    %492 = vmatprep.subr.mxu0 0.0
    %493 = vmatpush1.msra.mxu0 0.0
    %494 = vmatprep.subr.mxu0 0.0
    %495 = vmatpush1.msra.mxu0 0.0
    %496 = vmatprep.subr.mxu0 0.0
    %497 = vmatpush1.msra.mxu0 0.0
    %498 = vmatprep.subr.mxu0 0.0
    %499 = vmatpush1.msra.mxu0 0.0
    %500 = vmatprep.subr.mxu0 0.0
    %501 = vmatpush1.msra.mxu0 0.0
    %502 = vmatprep.subr.mxu0 0.0
    %503 = vmatpush1.msra.mxu0 0.0
    %504 = vmatprep.subr.mxu0 0.0
    %505 = vmatpush1.msra.mxu0 0.0
    %506 = vmatprep.subr.mxu0 0.0
    %507 = vmatpush1.msra.mxu0 0.0
    %508 = vmatprep.subr.mxu0 0.0
    %509 = vmatpush1.msra.mxu0 0.0
    %510 = vmatprep.subr.mxu0 0.0
    %511 = vmatpush1.msra.mxu0 0.0
    %512 = vmatprep.subr.mxu0 0.0
    %513 = vmatpush1.msra.mxu0 0.0
    %514 = vmatprep.subr.mxu0 0.0
    %515 = vmatpush1.msra.mxu0 0.0
    %516 = vmatprep.subr.mxu0 0.0
    %517 = vmatpush1.msra.mxu0 0.0
    %518 = vmatprep.subr.mxu0 0.0
    %519 = vmatpush1.msra.mxu0 0.0
    %520 = vmatprep.subr.mxu0 0.0
    %521 = vmatpush1.msra.mxu0 0.0
    %522 = vmatprep.subr.mxu0 0.0
    %523 = vmatpush1.msra.mxu0 0.0
    %524 = vmatprep.subr.mxu0 0.0
    %525 = vmatpush1.msra.mxu0 0.0
    %526 = vmatprep.mubr.f32.mxu0 0.0
    %527 = vmatmul.mubr.f32.gmra.mrb[0].mxu0 %v460
    %v528 = vpop.f32.mrb[0].mxu0
    %v529 = vadd.f32 %v143, %v528
    %v530 = vpop.f32.mrb[0].mxu0
    %531 = vdwg.mxu0
    %v532 = vxor.u32 %v529, 2147483648
    %v533 = vmul.f32 %v532, 1.442695
    %v534 = vpow.pop %v533
    %v535 = vadd.f32 %v534, 1.0
    %v536 = vrcp.pop %v535
    %v537 = vmul.f32 1.0, %v536
    %v538 = vtanh.pop %v529
    %v539 = vmul.f32 %v537, %v340
    %541 = vrot.lane.b32.xlu0 %v538, 96
    %v542 = vpop.permute.xlu0 %541
    %v544 = vmul.f32 %v537, %v542
    %546 = vrot.lane.b32.xlu0 %v544, 16
    %v547 = vpop.permute.xlu0 %546
    %v549 = vadd.f32 %v539, %v547
    %v550 = vtanh.pop %v549
    %552 = vrot.lane.b32.xlu0 %v550, 32
    %v553 = vpop.permute.xlu0 %552
    %v555 = vmul.f32 %v537, %v553
    %557 = vrot.lane.b32.xlu0 %v555, 80
    %v558 = vpop.permute.xlu0 %557
    %560 = vst.msk [vmem:[#allocation3 + $0x1] sm:$0x1] %vm351, %v558
    %v561 = vld [vmem:[#allocation2 + $0x2] sm:$0x1]
    %v562 = vsel %vm145, %v453, 0
    %564 = vmatprep.subr.mxu0 0.0
    %565 = vmatpush1.msra.mxu0 %v133
    %566 = vmatprep.subr.mxu0 0.0
    %567 = vmatpush1.msra.mxu0 %v134
    %568 = vmatprep.subr.mxu0 0.0
    %569 = vmatpush1.msra.mxu0 %v135
    %570 = vmatprep.subr.mxu0 0.0
    %571 = vmatpush1.msra.mxu0 %v136
    %572 = vmatprep.subr.mxu0 0.0
    %573 = vmatpush1.msra.mxu0 0.0
    %574 = vmatprep.subr.mxu0 0.0
    %575 = vmatpush1.msra.mxu0 0.0
    %576 = vmatprep.subr.mxu0 0.0
    %577 = vmatpush1.msra.mxu0 0.0
    %578 = vmatprep.subr.mxu0 0.0
    %579 = vmatpush1.msra.mxu0 0.0
    %580 = vmatprep.subr.mxu0 0.0
    %581 = vmatpush1.msra.mxu0 0.0
    %582 = vmatprep.subr.mxu0 0.0
    %583 = vmatpush1.msra.mxu0 0.0
    %584 = vmatprep.subr.mxu0 0.0
    %585 = vmatpush1.msra.mxu0 0.0
    %586 = vmatprep.subr.mxu0 0.0
    %587 = vmatpush1.msra.mxu0 0.0
    %588 = vmatprep.subr.mxu0 0.0
    %589 = vmatpush1.msra.mxu0 0.0
    %590 = vmatprep.subr.mxu0 0.0
    %591 = vmatpush1.msra.mxu0 0.0
    %592 = vmatprep.subr.mxu0 0.0
    %593 = vmatpush1.msra.mxu0 0.0
    %594 = vmatprep.subr.mxu0 0.0
    %595 = vmatpush1.msra.mxu0 0.0
    %596 = vmatprep.subr.mxu0 0.0
    %597 = vmatpush1.msra.mxu0 0.0
    %598 = vmatprep.subr.mxu0 0.0
    %599 = vmatpush1.msra.mxu0 0.0
    %600 = vmatprep.subr.mxu0 0.0
    %601 = vmatpush1.msra.mxu0 0.0
    %602 = vmatprep.subr.mxu0 0.0
    %603 = vmatpush1.msra.mxu0 0.0
    %604 = vmatprep.subr.mxu0 0.0
    %605 = vmatpush1.msra.mxu0 0.0
    %606 = vmatprep.subr.mxu0 0.0
    %607 = vmatpush1.msra.mxu0 0.0
    %608 = vmatprep.subr.mxu0 0.0
    %609 = vmatpush1.msra.mxu0 0.0
    %610 = vmatprep.subr.mxu0 0.0
    %611 = vmatpush1.msra.mxu0 0.0
    %612 = vmatprep.subr.mxu0 0.0
    %613 = vmatpush1.msra.mxu0 0.0
    %614 = vmatprep.subr.mxu0 0.0
    %615 = vmatpush1.msra.mxu0 0.0
    %616 = vmatprep.subr.mxu0 0.0
    %617 = vmatpush1.msra.mxu0 0.0
    %618 = vmatprep.subr.mxu0 0.0
    %619 = vmatpush1.msra.mxu0 0.0
    %620 = vmatprep.subr.mxu0 0.0
    %621 = vmatpush1.msra.mxu0 0.0
    %622 = vmatprep.subr.mxu0 0.0
    %623 = vmatpush1.msra.mxu0 0.0
    %624 = vmatprep.subr.mxu0 0.0
    %625 = vmatpush1.msra.mxu0 0.0
    %626 = vmatprep.subr.mxu0 0.0
    %627 = vmatpush1.msra.mxu0 0.0
    %628 = vmatprep.mubr.f32.mxu0 0.0
    %629 = vmatmul.mubr.f32.gmra.mrb[0].mxu0 %v562
    %v630 = vpop.f32.mrb[0].mxu0
    %v631 = vadd.f32 0.0, %v630
    %v632 = vpop.f32.mrb[0].mxu0
    %633 = vdwg.mxu0
    %v634 = vadd.f32 %v561, %v631
    %v635 = vxor.u32 %v634, 2147483648
    %v636 = vmul.f32 %v635, 1.442695
    %v637 = vpow.pop %v636
    %v638 = vadd.f32 %v637, 1.0
    %v639 = vrcp.pop %v638
    %v640 = vmul.f32 1.0, %v639
    %v641 = vtanh.pop %v634
    %v642 = vmul.f32 %v640, %v444
    %644 = vrot.lane.b32.xlu0 %v641, 64
    %v645 = vpop.permute.xlu0 %644
    %v647 = vmul.f32 %v640, %v645
    %649 = vrot.lane.b32.xlu0 %v647, 32
    %v650 = vpop.permute.xlu0 %649
    %v652 = vadd.f32 %v642, %v650
    %v653 = vtanh.pop %v652
    %655 = vrot.lane.b32.xlu0 %v653, 64
    %v656 = vpop.permute.xlu0 %655
    %v658 = vmul.f32 %v640, %v656
    %660 = vrot.lane.b32.xlu0 %v658, 32
    %v661 = vpop.permute.xlu0 %660
    %663 = vrot.lane.b32.xlu0 %v555, 112
    %v664 = vpop.permute.xlu0 %663
    %v666 = vsel %vm145, %v661, %v664
    %v668 = vsel %vm249, %v666, 0
    %670 = vmatprep.subr.mxu0 0.0
    %671 = vmatpush1.msra.mxu0 %v137
    %672 = vmatprep.subr.mxu0 0.0
    %673 = vmatpush1.msra.mxu0 %v138
    %674 = vmatprep.subr.mxu0 0.0
    %675 = vmatpush1.msra.mxu0 %v139
    %676 = vmatprep.subr.mxu0 0.0
    %677 = vmatpush1.msra.mxu0 %v140
    %678 = vmatprep.subr.mxu0 0.0
    %679 = vmatpush1.msra.mxu0 %v141
    %680 = vmatprep.subr.mxu0 0.0
    %681 = vmatpush1.msra.mxu0 %v142
    %682 = vmatprep.subr.mxu0 0.0
    %683 = vmatpush1.msra.mxu0 0.0
    %684 = vmatprep.subr.mxu0 0.0
    %685 = vmatpush1.msra.mxu0 0.0
    %686 = vmatprep.subr.mxu0 0.0
    %687 = vmatpush1.msra.mxu0 0.0
    %688 = vmatprep.subr.mxu0 0.0
    %689 = vmatpush1.msra.mxu0 0.0
    %690 = vmatprep.subr.mxu0 0.0
    %691 = vmatpush1.msra.mxu0 0.0
    %692 = vmatprep.subr.mxu0 0.0
    %693 = vmatpush1.msra.mxu0 0.0
    %694 = vmatprep.subr.mxu0 0.0
    %695 = vmatpush1.msra.mxu0 0.0
    %696 = vmatprep.subr.mxu0 0.0
    %697 = vmatpush1.msra.mxu0 0.0
    %698 = vmatprep.subr.mxu0 0.0
    %699 = vmatpush1.msra.mxu0 0.0
    %700 = vmatprep.subr.mxu0 0.0
    %701 = vmatpush1.msra.mxu0 0.0
    %702 = vmatprep.subr.mxu0 0.0
    %703 = vmatpush1.msra.mxu0 0.0
    %704 = vmatprep.subr.mxu0 0.0
    %705 = vmatpush1.msra.mxu0 0.0
    %706 = vmatprep.subr.mxu0 0.0
    %707 = vmatpush1.msra.mxu0 0.0
    %708 = vmatprep.subr.mxu0 0.0
    %709 = vmatpush1.msra.mxu0 0.0
    %710 = vmatprep.subr.mxu0 0.0
    %711 = vmatpush1.msra.mxu0 0.0
    %712 = vmatprep.subr.mxu0 0.0
    %713 = vmatpush1.msra.mxu0 0.0
    %714 = vmatprep.subr.mxu0 0.0
    %715 = vmatpush1.msra.mxu0 0.0
    %716 = vmatprep.subr.mxu0 0.0
    %717 = vmatpush1.msra.mxu0 0.0
    %718 = vmatprep.subr.mxu0 0.0
    %719 = vmatpush1.msra.mxu0 0.0
    %720 = vmatprep.subr.mxu0 0.0
    %721 = vmatpush1.msra.mxu0 0.0
    %722 = vmatprep.subr.mxu0 0.0
    %723 = vmatpush1.msra.mxu0 0.0
    %724 = vmatprep.subr.mxu0 0.0
    %725 = vmatpush1.msra.mxu0 0.0
    %726 = vmatprep.subr.mxu0 0.0
    %727 = vmatpush1.msra.mxu0 0.0
    %728 = vmatprep.subr.mxu0 0.0
    %729 = vmatpush1.msra.mxu0 0.0
    %730 = vmatprep.subr.mxu0 0.0
    %731 = vmatpush1.msra.mxu0 0.0
    %732 = vmatprep.subr.mxu0 0.0
    %733 = vmatpush1.msra.mxu0 0.0
    %734 = vmatprep.mubr.f32.mxu0 0.0
    %735 = vmatmul.mubr.f32.gmra.mrb[0].mxu0 %v668
    %v736 = vpop.f32.mrb[0].mxu0
    %v737 = vadd.f32 %v143, %v736
    %v738 = vpop.f32.mrb[0].mxu0
    %739 = vdwg.mxu0
    %v740 = vxor.u32 %v737, 2147483648
    %v741 = vmul.f32 %v740, 1.442695
    %v742 = vpow.pop %v741
    %v743 = vadd.f32 %v742, 1.0
    %v744 = vrcp.pop %v743
    %v745 = vmul.f32 1.0, %v744
    %v746 = vtanh.pop %v737
    %v747 = vmul.f32 %v745, %v549
    %749 = vrot.lane.b32.xlu0 %v746, 96
    %v750 = vpop.permute.xlu0 %749
    %v752 = vmul.f32 %v745, %v750
    %754 = vrot.lane.b32.xlu0 %v752, 16
    %v755 = vpop.permute.xlu0 %754
    %v757 = vadd.f32 %v747, %v755
    %v758 = vtanh.pop %v757
    %760 = vrot.lane.b32.xlu0 %v758, 32
    %v761 = vpop.permute.xlu0 %760
    %v763 = vmul.f32 %v745, %v761
    %765 = vrot.lane.b32.xlu0 %v763, 80
    %v766 = vpop.permute.xlu0 %765
    %768 = vst.msk [vmem:[#allocation3 + $0x2] sm:$0x1] %vm351, %v766
    %v769 = vld [vmem:[#allocation2 + $0x3] sm:$0x1]
    %v770 = vsel %vm145, %v661, 0
    %772 = vmatprep.subr.mxu0 0.0
    %773 = vmatpush1.msra.mxu0 %v133
    %774 = vmatprep.subr.mxu0 0.0
    %775 = vmatpush1.msra.mxu0 %v134
    %776 = vmatprep.subr.mxu0 0.0
    %777 = vmatpush1.msra.mxu0 %v135
    %778 = vmatprep.subr.mxu0 0.0
    %779 = vmatpush1.msra.mxu0 %v136
    %780 = vmatprep.subr.mxu0 0.0
    %781 = vmatpush1.msra.mxu0 0.0
    %782 = vmatprep.subr.mxu0 0.0
    %783 = vmatpush1.msra.mxu0 0.0
    %784 = vmatprep.subr.mxu0 0.0
    %785 = vmatpush1.msra.mxu0 0.0
    %786 = vmatprep.subr.mxu0 0.0
    %787 = vmatpush1.msra.mxu0 0.0
    %788 = vmatprep.subr.mxu0 0.0
    %789 = vmatpush1.msra.mxu0 0.0
    %790 = vmatprep.subr.mxu0 0.0
    %791 = vmatpush1.msra.mxu0 0.0
    %792 = vmatprep.subr.mxu0 0.0
    %793 = vmatpush1.msra.mxu0 0.0
    %794 = vmatprep.subr.mxu0 0.0
    %795 = vmatpush1.msra.mxu0 0.0
    %796 = vmatprep.subr.mxu0 0.0
    %797 = vmatpush1.msra.mxu0 0.0
    %798 = vmatprep.subr.mxu0 0.0
    %799 = vmatpush1.msra.mxu0 0.0
    %800 = vmatprep.subr.mxu0 0.0
    %801 = vmatpush1.msra.mxu0 0.0
    %802 = vmatprep.subr.mxu0 0.0
    %803 = vmatpush1.msra.mxu0 0.0
    %804 = vmatprep.subr.mxu0 0.0
    %805 = vmatpush1.msra.mxu0 0.0
    %806 = vmatprep.subr.mxu0 0.0
    %807 = vmatpush1.msra.mxu0 0.0
    %808 = vmatprep.subr.mxu0 0.0
    %809 = vmatpush1.msra.mxu0 0.0
    %810 = vmatprep.subr.mxu0 0.0
    %811 = vmatpush1.msra.mxu0 0.0
    %812 = vmatprep.subr.mxu0 0.0
    %813 = vmatpush1.msra.mxu0 0.0
    %814 = vmatprep.subr.mxu0 0.0
    %815 = vmatpush1.msra.mxu0 0.0
    %816 = vmatprep.subr.mxu0 0.0
    %817 = vmatpush1.msra.mxu0 0.0
    %818 = vmatprep.subr.mxu0 0.0
    %819 = vmatpush1.msra.mxu0 0.0
    %820 = vmatprep.subr.mxu0 0.0
    %821 = vmatpush1.msra.mxu0 0.0
    %822 = vmatprep.subr.mxu0 0.0
    %823 = vmatpush1.msra.mxu0 0.0
    %824 = vmatprep.subr.mxu0 0.0
    %825 = vmatpush1.msra.mxu0 0.0
    %826 = vmatprep.subr.mxu0 0.0
    %827 = vmatpush1.msra.mxu0 0.0
    %828 = vmatprep.subr.mxu0 0.0
    %829 = vmatpush1.msra.mxu0 0.0
    %830 = vmatprep.subr.mxu0 0.0
    %831 = vmatpush1.msra.mxu0 0.0
    %832 = vmatprep.subr.mxu0 0.0
    %833 = vmatpush1.msra.mxu0 0.0
    %834 = vmatprep.subr.mxu0 0.0
    %835 = vmatpush1.msra.mxu0 0.0
    %836 = vmatprep.mubr.f32.mxu0 0.0
    %837 = vmatmul.mubr.f32.gmra.mrb[0].mxu0 %v770
    %v838 = vpop.f32.mrb[0].mxu0
    %v839 = vadd.f32 0.0, %v838
    %v840 = vpop.f32.mrb[0].mxu0
    %841 = vdwg.mxu0
    %v842 = vadd.f32 %v769, %v839
    %v843 = vxor.u32 %v842, 2147483648
    %v844 = vmul.f32 %v843, 1.442695
    %v845 = vpow.pop %v844
    %v846 = vadd.f32 %v845, 1.0
    %v847 = vrcp.pop %v846
    %v848 = vmul.f32 1.0, %v847
    %v849 = vtanh.pop %v842
    %v850 = vmul.f32 %v848, %v652
    %852 = vrot.lane.b32.xlu0 %v849, 64
    %v853 = vpop.permute.xlu0 %852
    %v855 = vmul.f32 %v848, %v853
    %857 = vrot.lane.b32.xlu0 %v855, 32
    %v858 = vpop.permute.xlu0 %857
    %v860 = vadd.f32 %v850, %v858
    %v861 = vtanh.pop %v860
    %863 = vrot.lane.b32.xlu0 %v861, 64
    %v864 = vpop.permute.xlu0 %863
    %v866 = vmul.f32 %v848, %v864
    %868 = vrot.lane.b32.xlu0 %v866, 32
    %v869 = vpop.permute.xlu0 %868
    %871 = vrot.lane.b32.xlu0 %v763, 112
    %v872 = vpop.permute.xlu0 %871
    %v874 = vsel %vm145, %v869, %v872
    %v876 = vsel %vm249, %v874, 0
    %878 = vmatprep.subr.mxu0 0.0
    %879 = vmatpush1.msra.mxu0 %v137
    %880 = vmatprep.subr.mxu0 0.0
    %881 = vmatpush1.msra.mxu0 %v138
    %882 = vmatprep.subr.mxu0 0.0
    %883 = vmatpush1.msra.mxu0 %v139
    %884 = vmatprep.subr.mxu0 0.0
    %885 = vmatpush1.msra.mxu0 %v140
    %886 = vmatprep.subr.mxu0 0.0
    %887 = vmatpush1.msra.mxu0 %v141
    %888 = vmatprep.subr.mxu0 0.0
    %889 = vmatpush1.msra.mxu0 %v142
    %890 = vmatprep.subr.mxu0 0.0
    %891 = vmatpush1.msra.mxu0 0.0
    %892 = vmatprep.subr.mxu0 0.0
    %893 = vmatpush1.msra.mxu0 0.0
    %894 = vmatprep.subr.mxu0 0.0
    %895 = vmatpush1.msra.mxu0 0.0
    %896 = vmatprep.subr.mxu0 0.0
    %897 = vmatpush1.msra.mxu0 0.0
    %898 = vmatprep.subr.mxu0 0.0
    %899 = vmatpush1.msra.mxu0 0.0
    %900 = vmatprep.subr.mxu0 0.0
    %901 = vmatpush1.msra.mxu0 0.0
    %902 = vmatprep.subr.mxu0 0.0
    %903 = vmatpush1.msra.mxu0 0.0
    %904 = vmatprep.subr.mxu0 0.0
    %905 = vmatpush1.msra.mxu0 0.0
    %906 = vmatprep.subr.mxu0 0.0
    %907 = vmatpush1.msra.mxu0 0.0
    %908 = vmatprep.subr.mxu0 0.0
    %909 = vmatpush1.msra.mxu0 0.0
    %910 = vmatprep.subr.mxu0 0.0
    %911 = vmatpush1.msra.mxu0 0.0
    %912 = vmatprep.subr.mxu0 0.0
    %913 = vmatpush1.msra.mxu0 0.0
    %914 = vmatprep.subr.mxu0 0.0
    %915 = vmatpush1.msra.mxu0 0.0
    %916 = vmatprep.subr.mxu0 0.0
    %917 = vmatpush1.msra.mxu0 0.0
    %918 = vmatprep.subr.mxu0 0.0
    %919 = vmatpush1.msra.mxu0 0.0
    %920 = vmatprep.subr.mxu0 0.0
    %921 = vmatpush1.msra.mxu0 0.0
    %922 = vmatprep.subr.mxu0 0.0
    %923 = vmatpush1.msra.mxu0 0.0
    %924 = vmatprep.subr.mxu0 0.0
    %925 = vmatpush1.msra.mxu0 0.0
    %926 = vmatprep.subr.mxu0 0.0
    %927 = vmatpush1.msra.mxu0 0.0
    %928 = vmatprep.subr.mxu0 0.0
    %929 = vmatpush1.msra.mxu0 0.0
    %930 = vmatprep.subr.mxu0 0.0
    %931 = vmatpush1.msra.mxu0 0.0
    %932 = vmatprep.subr.mxu0 0.0
    %933 = vmatpush1.msra.mxu0 0.0
    %934 = vmatprep.subr.mxu0 0.0
    %935 = vmatpush1.msra.mxu0 0.0
    %936 = vmatprep.subr.mxu0 0.0
    %937 = vmatpush1.msra.mxu0 0.0
    %938 = vmatprep.subr.mxu0 0.0
    %939 = vmatpush1.msra.mxu0 0.0
    %940 = vmatprep.subr.mxu0 0.0
    %941 = vmatpush1.msra.mxu0 0.0
    %942 = vmatprep.mubr.f32.mxu0 0.0
    %943 = vmatmul.mubr.f32.gmra.mrb[0].mxu0 %v876
    %v944 = vpop.f32.mrb[0].mxu0
    %v945 = vadd.f32 %v143, %v944
    %v946 = vpop.f32.mrb[0].mxu0
    %947 = vdwg.mxu0
    %v948 = vxor.u32 %v945, 2147483648
    %v949 = vmul.f32 %v948, 1.442695
    %v950 = vpow.pop %v949
    %v951 = vadd.f32 %v950, 1.0
    %v952 = vrcp.pop %v951
    %v953 = vmul.f32 1.0, %v952
    %v954 = vtanh.pop %v945
    %v955 = vmul.f32 %v953, %v757
    %957 = vrot.lane.b32.xlu0 %v954, 96
    %v958 = vpop.permute.xlu0 %957
    %v960 = vmul.f32 %v953, %v958
    %962 = vrot.lane.b32.xlu0 %v960, 16
    %v963 = vpop.permute.xlu0 %962
    %v965 = vadd.f32 %v955, %v963
    %v966 = vtanh.pop %v965
    %968 = vrot.lane.b32.xlu0 %v966, 32
    %v969 = vpop.permute.xlu0 %968
    %v971 = vmul.f32 %v953, %v969
    %973 = vrot.lane.b32.xlu0 %v971, 80
    %v974 = vpop.permute.xlu0 %973
    %976 = vst.msk [vmem:[#allocation3 + $0x3] sm:$0x1] %vm351, %v974
    %v977 = vld [vmem:[#allocation2 + $0x4] sm:$0x1]
    %v978 = vsel %vm145, %v869, 0
    %980 = vmatprep.subr.mxu0 0.0
    %981 = vmatpush1.msra.mxu0 %v133
    %982 = vmatprep.subr.mxu0 0.0
    %983 = vmatpush1.msra.mxu0 %v134
    %984 = vmatprep.subr.mxu0 0.0
    %985 = vmatpush1.msra.mxu0 %v135
    %986 = vmatprep.subr.mxu0 0.0
    %987 = vmatpush1.msra.mxu0 %v136
    %988 = vmatprep.subr.mxu0 0.0
    %989 = vmatpush1.msra.mxu0 0.0
    %990 = vmatprep.subr.mxu0 0.0
    %991 = vmatpush1.msra.mxu0 0.0
    %992 = vmatprep.subr.mxu0 0.0
    %993 = vmatpush1.msra.mxu0 0.0
    %994 = vmatprep.subr.mxu0 0.0
    %995 = vmatpush1.msra.mxu0 0.0
    %996 = vmatprep.subr.mxu0 0.0
    %997 = vmatpush1.msra.mxu0 0.0
    %998 = vmatprep.subr.mxu0 0.0
    %999 = vmatpush1.msra.mxu0 0.0
    %1000 = vmatprep.subr.mxu0 0.0
    %1001 = vmatpush1.msra.mxu0 0.0
    %1002 = vmatprep.subr.mxu0 0.0
    %1003 = vmatpush1.msra.mxu0 0.0
    %1004 = vmatprep.subr.mxu0 0.0
    %1005 = vmatpush1.msra.mxu0 0.0
    %1006 = vmatprep.subr.mxu0 0.0
    %1007 = vmatpush1.msra.mxu0 0.0
    %1008 = vmatprep.subr.mxu0 0.0
    %1009 = vmatpush1.msra.mxu0 0.0
    %1010 = vmatprep.subr.mxu0 0.0
    %1011 = vmatpush1.msra.mxu0 0.0
    %1012 = vmatprep.subr.mxu0 0.0
    %1013 = vmatpush1.msra.mxu0 0.0
    %1014 = vmatprep.subr.mxu0 0.0
    %1015 = vmatpush1.msra.mxu0 0.0
    %1016 = vmatprep.subr.mxu0 0.0
    %1017 = vmatpush1.msra.mxu0 0.0
    %1018 = vmatprep.subr.mxu0 0.0
    %1019 = vmatpush1.msra.mxu0 0.0
    %1020 = vmatprep.subr.mxu0 0.0
    %1021 = vmatpush1.msra.mxu0 0.0
    %1022 = vmatprep.subr.mxu0 0.0
    %1023 = vmatpush1.msra.mxu0 0.0
    %1024 = vmatprep.subr.mxu0 0.0
    %1025 = vmatpush1.msra.mxu0 0.0
    %1026 = vmatprep.subr.mxu0 0.0
    %1027 = vmatpush1.msra.mxu0 0.0
    %1028 = vmatprep.subr.mxu0 0.0
    %1029 = vmatpush1.msra.mxu0 0.0
    %1030 = vmatprep.subr.mxu0 0.0
    %1031 = vmatpush1.msra.mxu0 0.0
    %1032 = vmatprep.subr.mxu0 0.0
    %1033 = vmatpush1.msra.mxu0 0.0
    %1034 = vmatprep.subr.mxu0 0.0
    %1035 = vmatpush1.msra.mxu0 0.0
    %1036 = vmatprep.subr.mxu0 0.0
    %1037 = vmatpush1.msra.mxu0 0.0
    %1038 = vmatprep.subr.mxu0 0.0
    %1039 = vmatpush1.msra.mxu0 0.0
    %1040 = vmatprep.subr.mxu0 0.0
    %1041 = vmatpush1.msra.mxu0 0.0
    %1042 = vmatprep.subr.mxu0 0.0
    %1043 = vmatpush1.msra.mxu0 0.0
    %1044 = vmatprep.mubr.f32.mxu0 0.0
    %1045 = vmatmul.mubr.f32.gmra.mrb[0].mxu0 %v978
    %v1046 = vpop.f32.mrb[0].mxu0
    %v1047 = vadd.f32 0.0, %v1046
    %v1048 = vpop.f32.mrb[0].mxu0
    %1049 = vdwg.mxu0
    %v1050 = vadd.f32 %v977, %v1047
    %v1051 = vxor.u32 %v1050, 2147483648
    %v1052 = vmul.f32 %v1051, 1.442695
    %v1053 = vpow.pop %v1052
    %v1054 = vadd.f32 %v1053, 1.0
    %v1055 = vrcp.pop %v1054
    %v1056 = vmul.f32 1.0, %v1055
    %v1057 = vtanh.pop %v1050
    %v1058 = vmul.f32 %v1056, %v860
    %1060 = vrot.lane.b32.xlu0 %v1057, 64
    %v1061 = vpop.permute.xlu0 %1060
    %v1063 = vmul.f32 %v1056, %v1061
    %1065 = vrot.lane.b32.xlu0 %v1063, 32
    %v1066 = vpop.permute.xlu0 %1065
    %v1068 = vadd.f32 %v1058, %v1066
    %v1069 = vtanh.pop %v1068
    %1071 = vrot.lane.b32.xlu0 %v1069, 64
    %v1072 = vpop.permute.xlu0 %1071
    %v1074 = vmul.f32 %v1056, %v1072
    %1076 = vrot.lane.b32.xlu0 %v1074, 32
    %v1077 = vpop.permute.xlu0 %1076
    %1079 = vrot.lane.b32.xlu0 %v971, 112
    %v1080 = vpop.permute.xlu0 %1079
    %v1082 = vsel %vm145, %v1077, %v1080
    %v1084 = vsel %vm249, %v1082, 0
    %1086 = vmatprep.subr.mxu0 0.0
    %1087 = vmatpush1.msra.mxu0 %v137
    %1088 = vmatprep.subr.mxu0 0.0
    %1089 = vmatpush1.msra.mxu0 %v138
    %1090 = vmatprep.subr.mxu0 0.0
    %1091 = vmatpush1.msra.mxu0 %v139
    %1092 = vmatprep.subr.mxu0 0.0
    %1093 = vmatpush1.msra.mxu0 %v140
    %1094 = vmatprep.subr.mxu0 0.0
    %1095 = vmatpush1.msra.mxu0 %v141
    %1096 = vmatprep.subr.mxu0 0.0
    %1097 = vmatpush1.msra.mxu0 %v142
    %1098 = vmatprep.subr.mxu0 0.0
    %1099 = vmatpush1.msra.mxu0 0.0
    %1100 = vmatprep.subr.mxu0 0.0
    %1101 = vmatpush1.msra.mxu0 0.0
    %1102 = vmatprep.subr.mxu0 0.0
    %1103 = vmatpush1.msra.mxu0 0.0
    %1104 = vmatprep.subr.mxu0 0.0
    %1105 = vmatpush1.msra.mxu0 0.0
    %1106 = vmatprep.subr.mxu0 0.0
    %1107 = vmatpush1.msra.mxu0 0.0
    %1108 = vmatprep.subr.mxu0 0.0
    %1109 = vmatpush1.msra.mxu0 0.0
    %1110 = vmatprep.subr.mxu0 0.0
    %1111 = vmatpush1.msra.mxu0 0.0
    %1112 = vmatprep.subr.mxu0 0.0
    %1113 = vmatpush1.msra.mxu0 0.0
    %1114 = vmatprep.subr.mxu0 0.0
    %1115 = vmatpush1.msra.mxu0 0.0
    %1116 = vmatprep.subr.mxu0 0.0
    %1117 = vmatpush1.msra.mxu0 0.0
    %1118 = vmatprep.subr.mxu0 0.0
    %1119 = vmatpush1.msra.mxu0 0.0
    %1120 = vmatprep.subr.mxu0 0.0
    %1121 = vmatpush1.msra.mxu0 0.0
    %1122 = vmatprep.subr.mxu0 0.0
    %1123 = vmatpush1.msra.mxu0 0.0
    %1124 = vmatprep.subr.mxu0 0.0
    %1125 = vmatpush1.msra.mxu0 0.0
    %1126 = vmatprep.subr.mxu0 0.0
    %1127 = vmatpush1.msra.mxu0 0.0
    %1128 = vmatprep.subr.mxu0 0.0
    %1129 = vmatpush1.msra.mxu0 0.0
    %1130 = vmatprep.subr.mxu0 0.0
    %1131 = vmatpush1.msra.mxu0 0.0
    %1132 = vmatprep.subr.mxu0 0.0
    %1133 = vmatpush1.msra.mxu0 0.0
    %1134 = vmatprep.subr.mxu0 0.0
    %1135 = vmatpush1.msra.mxu0 0.0
    %1136 = vmatprep.subr.mxu0 0.0
    %1137 = vmatpush1.msra.mxu0 0.0
    %1138 = vmatprep.subr.mxu0 0.0
    %1139 = vmatpush1.msra.mxu0 0.0
    %1140 = vmatprep.subr.mxu0 0.0
    %1141 = vmatpush1.msra.mxu0 0.0
    %1142 = vmatprep.subr.mxu0 0.0
    %1143 = vmatpush1.msra.mxu0 0.0
    %1144 = vmatprep.subr.mxu0 0.0
    %1145 = vmatpush1.msra.mxu0 0.0
    %1146 = vmatprep.subr.mxu0 0.0
    %1147 = vmatpush1.msra.mxu0 0.0
    %1148 = vmatprep.subr.mxu0 0.0
    %1149 = vmatpush1.msra.mxu0 0.0
    %1150 = vmatprep.mubr.f32.mxu0 0.0
    %1151 = vmatmul.mubr.f32.gmra.mrb[0].mxu0 %v1084
    %v1152 = vpop.f32.mrb[0].mxu0
    %v1153 = vadd.f32 %v143, %v1152
    %v1154 = vpop.f32.mrb[0].mxu0
    %1155 = vdwg.mxu0
    %v1156 = vxor.u32 %v1153, 2147483648
    %v1157 = vmul.f32 %v1156, 1.442695
    %v1158 = vpow.pop %v1157
    %v1159 = vadd.f32 %v1158, 1.0
    %v1160 = vrcp.pop %v1159
    %v1161 = vmul.f32 1.0, %v1160
    %v1162 = vtanh.pop %v1153
    %v1163 = vmul.f32 %v1161, %v965
    %1165 = vrot.lane.b32.xlu0 %v1162, 96
    %v1166 = vpop.permute.xlu0 %1165
    %v1168 = vmul.f32 %v1161, %v1166
    %1170 = vrot.lane.b32.xlu0 %v1168, 16
    %v1171 = vpop.permute.xlu0 %1170
    %v1173 = vadd.f32 %v1163, %v1171
    %v1174 = vtanh.pop %v1173
    %1176 = vrot.lane.b32.xlu0 %v1174, 32
    %v1177 = vpop.permute.xlu0 %1176
    %v1179 = vmul.f32 %v1161, %v1177
    %1181 = vrot.lane.b32.xlu0 %v1179, 80
    %v1182 = vpop.permute.xlu0 %1181
    %1184 = vst.msk [vmem:[#allocation3 + $0x4] sm:$0x1] %vm351, %v1182
    %v1185 = vld [vmem:[#allocation2 + $0x5] sm:$0x1]
    %v1186 = vsel %vm145, %v1077, 0
    %1188 = vmatprep.subr.mxu0 0.0
    %1189 = vmatpush1.msra.mxu0 %v133
    %1190 = vmatprep.subr.mxu0 0.0
    %1191 = vmatpush1.msra.mxu0 %v134
    %1192 = vmatprep.subr.mxu0 0.0
    %1193 = vmatpush1.msra.mxu0 %v135
    %1194 = vmatprep.subr.mxu0 0.0
    %1195 = vmatpush1.msra.mxu0 %v136
    %1196 = vmatprep.subr.mxu0 0.0
    %1197 = vmatpush1.msra.mxu0 0.0
    %1198 = vmatprep.subr.mxu0 0.0
    %1199 = vmatpush1.msra.mxu0 0.0
    %1200 = vmatprep.subr.mxu0 0.0
    %1201 = vmatpush1.msra.mxu0 0.0
    %1202 = vmatprep.subr.mxu0 0.0
    %1203 = vmatpush1.msra.mxu0 0.0
    %1204 = vmatprep.subr.mxu0 0.0
    %1205 = vmatpush1.msra.mxu0 0.0
    %1206 = vmatprep.subr.mxu0 0.0
    %1207 = vmatpush1.msra.mxu0 0.0
    %1208 = vmatprep.subr.mxu0 0.0
    %1209 = vmatpush1.msra.mxu0 0.0
    %1210 = vmatprep.subr.mxu0 0.0
    %1211 = vmatpush1.msra.mxu0 0.0
    %1212 = vmatprep.subr.mxu0 0.0
    %1213 = vmatpush1.msra.mxu0 0.0
    %1214 = vmatprep.subr.mxu0 0.0
    %1215 = vmatpush1.msra.mxu0 0.0
    %1216 = vmatprep.subr.mxu0 0.0
    %1217 = vmatpush1.msra.mxu0 0.0
    %1218 = vmatprep.subr.mxu0 0.0
    %1219 = vmatpush1.msra.mxu0 0.0
    %1220 = vmatprep.subr.mxu0 0.0
    %1221 = vmatpush1.msra.mxu0 0.0
    %1222 = vmatprep.subr.mxu0 0.0
    %1223 = vmatpush1.msra.mxu0 0.0
    %1224 = vmatprep.subr.mxu0 0.0
    %1225 = vmatpush1.msra.mxu0 0.0
    %1226 = vmatprep.subr.mxu0 0.0
    %1227 = vmatpush1.msra.mxu0 0.0
    %1228 = vmatprep.subr.mxu0 0.0
    %1229 = vmatpush1.msra.mxu0 0.0
    %1230 = vmatprep.subr.mxu0 0.0
    %1231 = vmatpush1.msra.mxu0 0.0
    %1232 = vmatprep.subr.mxu0 0.0
    %1233 = vmatpush1.msra.mxu0 0.0
    %1234 = vmatprep.subr.mxu0 0.0
    %1235 = vmatpush1.msra.mxu0 0.0
    %1236 = vmatprep.subr.mxu0 0.0
    %1237 = vmatpush1.msra.mxu0 0.0
    %1238 = vmatprep.subr.mxu0 0.0
    %1239 = vmatpush1.msra.mxu0 0.0
    %1240 = vmatprep.subr.mxu0 0.0
    %1241 = vmatpush1.msra.mxu0 0.0
    %1242 = vmatprep.subr.mxu0 0.0
    %1243 = vmatpush1.msra.mxu0 0.0
    %1244 = vmatprep.subr.mxu0 0.0
    %1245 = vmatpush1.msra.mxu0 0.0
    %1246 = vmatprep.subr.mxu0 0.0
    %1247 = vmatpush1.msra.mxu0 0.0
    %1248 = vmatprep.subr.mxu0 0.0
    %1249 = vmatpush1.msra.mxu0 0.0
    %1250 = vmatprep.subr.mxu0 0.0
    %1251 = vmatpush1.msra.mxu0 0.0
    %1252 = vmatprep.mubr.f32.mxu0 0.0
    %1253 = vmatmul.mubr.f32.gmra.mrb[0].mxu0 %v1186
    %v1254 = vpop.f32.mrb[0].mxu0
    %v1255 = vadd.f32 0.0, %v1254
    %v1256 = vpop.f32.mrb[0].mxu0
    %1257 = vdwg.mxu0
    %v1258 = vadd.f32 %v1185, %v1255
    %v1259 = vxor.u32 %v1258, 2147483648
    %v1260 = vmul.f32 %v1259, 1.442695
    %v1261 = vpow.pop %v1260
    %v1262 = vadd.f32 %v1261, 1.0
    %v1263 = vrcp.pop %v1262
    %v1264 = vmul.f32 1.0, %v1263
    %v1265 = vtanh.pop %v1258
    %v1266 = vmul.f32 %v1264, %v1068
    %1268 = vrot.lane.b32.xlu0 %v1265, 64
    %v1269 = vpop.permute.xlu0 %1268
    %v1271 = vmul.f32 %v1264, %v1269
    %1273 = vrot.lane.b32.xlu0 %v1271, 32
    %v1274 = vpop.permute.xlu0 %1273
    %v1276 = vadd.f32 %v1266, %v1274
    %v1277 = vtanh.pop %v1276
    %1279 = vrot.lane.b32.xlu0 %v1277, 64
    %v1280 = vpop.permute.xlu0 %1279
    %v1282 = vmul.f32 %v1264, %v1280
    %1284 = vrot.lane.b32.xlu0 %v1282, 32
    %v1285 = vpop.permute.xlu0 %1284
    %1287 = vrot.lane.b32.xlu0 %v1179, 112
    %v1288 = vpop.permute.xlu0 %1287
    %v1290 = vsel %vm145, %v1285, %v1288
    %v1292 = vsel %vm249, %v1290, 0
    %1294 = vmatprep.subr.mxu0 0.0
    %1295 = vmatpush1.msra.mxu0 %v137
    %1296 = vmatprep.subr.mxu0 0.0
    %1297 = vmatpush1.msra.mxu0 %v138
    %1298 = vmatprep.subr.mxu0 0.0
    %1299 = vmatpush1.msra.mxu0 %v139
    %1300 = vmatprep.subr.mxu0 0.0
    %1301 = vmatpush1.msra.mxu0 %v140
    %1302 = vmatprep.subr.mxu0 0.0
    %1303 = vmatpush1.msra.mxu0 %v141
    %1304 = vmatprep.subr.mxu0 0.0
    %1305 = vmatpush1.msra.mxu0 %v142
    %1306 = vmatprep.subr.mxu0 0.0
    %1307 = vmatpush1.msra.mxu0 0.0
    %1308 = vmatprep.subr.mxu0 0.0
    %1309 = vmatpush1.msra.mxu0 0.0
    %1310 = vmatprep.subr.mxu0 0.0
    %1311 = vmatpush1.msra.mxu0 0.0
    %1312 = vmatprep.subr.mxu0 0.0
    %1313 = vmatpush1.msra.mxu0 0.0
    %1314 = vmatprep.subr.mxu0 0.0
    %1315 = vmatpush1.msra.mxu0 0.0
    %1316 = vmatprep.subr.mxu0 0.0
    %1317 = vmatpush1.msra.mxu0 0.0
    %1318 = vmatprep.subr.mxu0 0.0
    %1319 = vmatpush1.msra.mxu0 0.0
    %1320 = vmatprep.subr.mxu0 0.0
    %1321 = vmatpush1.msra.mxu0 0.0
    %1322 = vmatprep.subr.mxu0 0.0
    %1323 = vmatpush1.msra.mxu0 0.0
    %1324 = vmatprep.subr.mxu0 0.0
    %1325 = vmatpush1.msra.mxu0 0.0
    %1326 = vmatprep.subr.mxu0 0.0
    %1327 = vmatpush1.msra.mxu0 0.0
    %1328 = vmatprep.subr.mxu0 0.0
    %1329 = vmatpush1.msra.mxu0 0.0
    %1330 = vmatprep.subr.mxu0 0.0
    %1331 = vmatpush1.msra.mxu0 0.0
    %1332 = vmatprep.subr.mxu0 0.0
    %1333 = vmatpush1.msra.mxu0 0.0
    %1334 = vmatprep.subr.mxu0 0.0
    %1335 = vmatpush1.msra.mxu0 0.0
    %1336 = vmatprep.subr.mxu0 0.0
    %1337 = vmatpush1.msra.mxu0 0.0
    %1338 = vmatprep.subr.mxu0 0.0
    %1339 = vmatpush1.msra.mxu0 0.0
    %1340 = vmatprep.subr.mxu0 0.0
    %1341 = vmatpush1.msra.mxu0 0.0
    %1342 = vmatprep.subr.mxu0 0.0
    %1343 = vmatpush1.msra.mxu0 0.0
    %1344 = vmatprep.subr.mxu0 0.0
    %1345 = vmatpush1.msra.mxu0 0.0
    %1346 = vmatprep.subr.mxu0 0.0
    %1347 = vmatpush1.msra.mxu0 0.0
    %1348 = vmatprep.subr.mxu0 0.0
    %1349 = vmatpush1.msra.mxu0 0.0
    %1350 = vmatprep.subr.mxu0 0.0
    %1351 = vmatpush1.msra.mxu0 0.0
    %1352 = vmatprep.subr.mxu0 0.0
    %1353 = vmatpush1.msra.mxu0 0.0
    %1354 = vmatprep.subr.mxu0 0.0
    %1355 = vmatpush1.msra.mxu0 0.0
    %1356 = vmatprep.subr.mxu0 0.0
    %1357 = vmatpush1.msra.mxu0 0.0
    %1358 = vmatprep.mubr.f32.mxu0 0.0
    %1359 = vmatmul.mubr.f32.gmra.mrb[0].mxu0 %v1292
    %v1360 = vpop.f32.mrb[0].mxu0
    %v1361 = vadd.f32 %v143, %v1360
    %v1362 = vpop.f32.mrb[0].mxu0
    %1363 = vdwg.mxu0
    %v1364 = vxor.u32 %v1361, 2147483648
    %v1365 = vmul.f32 %v1364, 1.442695
    %v1366 = vpow.pop %v1365
    %v1367 = vadd.f32 %v1366, 1.0
    %v1368 = vrcp.pop %v1367
    %v1369 = vmul.f32 1.0, %v1368
    %v1370 = vtanh.pop %v1361
    %v1371 = vmul.f32 %v1369, %v1173
    %1373 = vrot.lane.b32.xlu0 %v1370, 96
    %v1374 = vpop.permute.xlu0 %1373
    %v1376 = vmul.f32 %v1369, %v1374
    %1378 = vrot.lane.b32.xlu0 %v1376, 16
    %v1379 = vpop.permute.xlu0 %1378
    %v1381 = vadd.f32 %v1371, %v1379
    %v1382 = vtanh.pop %v1381
    %1384 = vrot.lane.b32.xlu0 %v1382, 32
    %v1385 = vpop.permute.xlu0 %1384
    %v1387 = vmul.f32 %v1369, %v1385
    %1389 = vrot.lane.b32.xlu0 %v1387, 80
    %v1390 = vpop.permute.xlu0 %1389
    %1392 = vst.msk [vmem:[#allocation3 + $0x5] sm:$0x1] %vm351, %v1390
    %v1393 = vld [vmem:[#allocation2 + $0x6] sm:$0x1]
    %v1394 = vsel %vm145, %v1285, 0
    %1396 = vmatprep.subr.mxu0 0.0
    %1397 = vmatpush1.msra.mxu0 %v133
    %1398 = vmatprep.subr.mxu0 0.0
    %1399 = vmatpush1.msra.mxu0 %v134
    %1400 = vmatprep.subr.mxu0 0.0
    %1401 = vmatpush1.msra.mxu0 %v135
    %1402 = vmatprep.subr.mxu0 0.0
    %1403 = vmatpush1.msra.mxu0 %v136
    %1404 = vmatprep.subr.mxu0 0.0
    %1405 = vmatpush1.msra.mxu0 0.0
    %1406 = vmatprep.subr.mxu0 0.0
    %1407 = vmatpush1.msra.mxu0 0.0
    %1408 = vmatprep.subr.mxu0 0.0
    %1409 = vmatpush1.msra.mxu0 0.0
    %1410 = vmatprep.subr.mxu0 0.0
    %1411 = vmatpush1.msra.mxu0 0.0
    %1412 = vmatprep.subr.mxu0 0.0
    %1413 = vmatpush1.msra.mxu0 0.0
    %1414 = vmatprep.subr.mxu0 0.0
    %1415 = vmatpush1.msra.mxu0 0.0
    %1416 = vmatprep.subr.mxu0 0.0
    %1417 = vmatpush1.msra.mxu0 0.0
    %1418 = vmatprep.subr.mxu0 0.0
    %1419 = vmatpush1.msra.mxu0 0.0
    %1420 = vmatprep.subr.mxu0 0.0
    %1421 = vmatpush1.msra.mxu0 0.0
    %1422 = vmatprep.subr.mxu0 0.0
    %1423 = vmatpush1.msra.mxu0 0.0
    %1424 = vmatprep.subr.mxu0 0.0
    %1425 = vmatpush1.msra.mxu0 0.0
    %1426 = vmatprep.subr.mxu0 0.0
    %1427 = vmatpush1.msra.mxu0 0.0
    %1428 = vmatprep.subr.mxu0 0.0
    %1429 = vmatpush1.msra.mxu0 0.0
    %1430 = vmatprep.subr.mxu0 0.0
    %1431 = vmatpush1.msra.mxu0 0.0
    %1432 = vmatprep.subr.mxu0 0.0
    %1433 = vmatpush1.msra.mxu0 0.0
    %1434 = vmatprep.subr.mxu0 0.0
    %1435 = vmatpush1.msra.mxu0 0.0
    %1436 = vmatprep.subr.mxu0 0.0
    %1437 = vmatpush1.msra.mxu0 0.0
    %1438 = vmatprep.subr.mxu0 0.0
    %1439 = vmatpush1.msra.mxu0 0.0
    %1440 = vmatprep.subr.mxu0 0.0
    %1441 = vmatpush1.msra.mxu0 0.0
    %1442 = vmatprep.subr.mxu0 0.0
    %1443 = vmatpush1.msra.mxu0 0.0
    %1444 = vmatprep.subr.mxu0 0.0
    %1445 = vmatpush1.msra.mxu0 0.0
    %1446 = vmatprep.subr.mxu0 0.0
    %1447 = vmatpush1.msra.mxu0 0.0
    %1448 = vmatprep.subr.mxu0 0.0
    %1449 = vmatpush1.msra.mxu0 0.0
    %1450 = vmatprep.subr.mxu0 0.0
    %1451 = vmatpush1.msra.mxu0 0.0
    %1452 = vmatprep.subr.mxu0 0.0
    %1453 = vmatpush1.msra.mxu0 0.0
    %1454 = vmatprep.subr.mxu0 0.0
    %1455 = vmatpush1.msra.mxu0 0.0
    %1456 = vmatprep.subr.mxu0 0.0
    %1457 = vmatpush1.msra.mxu0 0.0
    %1458 = vmatprep.subr.mxu0 0.0
    %1459 = vmatpush1.msra.mxu0 0.0
    %1460 = vmatprep.mubr.f32.mxu0 0.0
    %1461 = vmatmul.mubr.f32.gmra.mrb[0].mxu0 %v1394
    %v1462 = vpop.f32.mrb[0].mxu0
    %v1463 = vadd.f32 0.0, %v1462
    %v1464 = vpop.f32.mrb[0].mxu0
    %1465 = vdwg.mxu0
    %v1466 = vadd.f32 %v1393, %v1463
    %v1467 = vxor.u32 %v1466, 2147483648
    %v1468 = vmul.f32 %v1467, 1.442695
    %v1469 = vpow.pop %v1468
    %v1470 = vadd.f32 %v1469, 1.0
    %v1471 = vrcp.pop %v1470
    %v1472 = vmul.f32 1.0, %v1471
    %v1473 = vtanh.pop %v1466
    %v1474 = vmul.f32 %v1472, %v1276
    %1476 = vrot.lane.b32.xlu0 %v1473, 64
    %v1477 = vpop.permute.xlu0 %1476
    %v1479 = vmul.f32 %v1472, %v1477
    %1481 = vrot.lane.b32.xlu0 %v1479, 32
    %v1482 = vpop.permute.xlu0 %1481
    %v1484 = vadd.f32 %v1474, %v1482
    %v1485 = vtanh.pop %v1484
    %1487 = vrot.lane.b32.xlu0 %v1485, 64
    %v1488 = vpop.permute.xlu0 %1487
    %v1490 = vmul.f32 %v1472, %v1488
    %1492 = vrot.lane.b32.xlu0 %v1490, 32
    %v1493 = vpop.permute.xlu0 %1492
    %1495 = vrot.lane.b32.xlu0 %v1387, 112
    %v1496 = vpop.permute.xlu0 %1495
    %v1498 = vsel %vm145, %v1493, %v1496
    %v1500 = vsel %vm249, %v1498, 0
    %1502 = vmatprep.subr.mxu0 0.0
    %1503 = vmatpush1.msra.mxu0 %v137
    %1504 = vmatprep.subr.mxu0 0.0
    %1505 = vmatpush1.msra.mxu0 %v138
    %1506 = vmatprep.subr.mxu0 0.0
    %1507 = vmatpush1.msra.mxu0 %v139
    %1508 = vmatprep.subr.mxu0 0.0
    %1509 = vmatpush1.msra.mxu0 %v140
    %1510 = vmatprep.subr.mxu0 0.0
    %1511 = vmatpush1.msra.mxu0 %v141
    %1512 = vmatprep.subr.mxu0 0.0
    %1513 = vmatpush1.msra.mxu0 %v142
    %1514 = vmatprep.subr.mxu0 0.0
    %1515 = vmatpush1.msra.mxu0 0.0
    %1516 = vmatprep.subr.mxu0 0.0
    %1517 = vmatpush1.msra.mxu0 0.0
    %1518 = vmatprep.subr.mxu0 0.0
    %1519 = vmatpush1.msra.mxu0 0.0
    %1520 = vmatprep.subr.mxu0 0.0
    %1521 = vmatpush1.msra.mxu0 0.0
    %1522 = vmatprep.subr.mxu0 0.0
    %1523 = vmatpush1.msra.mxu0 0.0
    %1524 = vmatprep.subr.mxu0 0.0
    %1525 = vmatpush1.msra.mxu0 0.0
    %1526 = vmatprep.subr.mxu0 0.0
    %1527 = vmatpush1.msra.mxu0 0.0
    %1528 = vmatprep.subr.mxu0 0.0
    %1529 = vmatpush1.msra.mxu0 0.0
    %1530 = vmatprep.subr.mxu0 0.0
    %1531 = vmatpush1.msra.mxu0 0.0
    %1532 = vmatprep.subr.mxu0 0.0
    %1533 = vmatpush1.msra.mxu0 0.0
    %1534 = vmatprep.subr.mxu0 0.0
    %1535 = vmatpush1.msra.mxu0 0.0
    %1536 = vmatprep.subr.mxu0 0.0
    %1537 = vmatpush1.msra.mxu0 0.0
    %1538 = vmatprep.subr.mxu0 0.0
    %1539 = vmatpush1.msra.mxu0 0.0
    %1540 = vmatprep.subr.mxu0 0.0
    %1541 = vmatpush1.msra.mxu0 0.0
    %1542 = vmatprep.subr.mxu0 0.0
    %1543 = vmatpush1.msra.mxu0 0.0
    %1544 = vmatprep.subr.mxu0 0.0
    %1545 = vmatpush1.msra.mxu0 0.0
    %1546 = vmatprep.subr.mxu0 0.0
    %1547 = vmatpush1.msra.mxu0 0.0
    %1548 = vmatprep.subr.mxu0 0.0
    %1549 = vmatpush1.msra.mxu0 0.0
    %1550 = vmatprep.subr.mxu0 0.0
    %1551 = vmatpush1.msra.mxu0 0.0
    %1552 = vmatprep.subr.mxu0 0.0
    %1553 = vmatpush1.msra.mxu0 0.0
    %1554 = vmatprep.subr.mxu0 0.0
    %1555 = vmatpush1.msra.mxu0 0.0
    %1556 = vmatprep.subr.mxu0 0.0
    %1557 = vmatpush1.msra.mxu0 0.0
    %1558 = vmatprep.subr.mxu0 0.0
    %1559 = vmatpush1.msra.mxu0 0.0
    %1560 = vmatprep.subr.mxu0 0.0
    %1561 = vmatpush1.msra.mxu0 0.0
    %1562 = vmatprep.subr.mxu0 0.0
    %1563 = vmatpush1.msra.mxu0 0.0
    %1564 = vmatprep.subr.mxu0 0.0
    %1565 = vmatpush1.msra.mxu0 0.0
    %1566 = vmatprep.mubr.f32.mxu0 0.0
    %1567 = vmatmul.mubr.f32.gmra.mrb[0].mxu0 %v1500
    %v1568 = vpop.f32.mrb[0].mxu0
    %v1569 = vadd.f32 %v143, %v1568
    %v1570 = vpop.f32.mrb[0].mxu0
    %1571 = vdwg.mxu0
    %v1572 = vxor.u32 %v1569, 2147483648
    %v1573 = vmul.f32 %v1572, 1.442695
    %v1574 = vpow.pop %v1573
    %v1575 = vadd.f32 %v1574, 1.0
    %v1576 = vrcp.pop %v1575
    %v1577 = vmul.f32 1.0, %v1576
    %v1578 = vtanh.pop %v1569
    %v1579 = vmul.f32 %v1577, %v1381
    %1581 = vrot.lane.b32.xlu0 %v1578, 96
    %v1582 = vpop.permute.xlu0 %1581
    %v1584 = vmul.f32 %v1577, %v1582
    %1586 = vrot.lane.b32.xlu0 %v1584, 16
    %v1587 = vpop.permute.xlu0 %1586
    %v1589 = vadd.f32 %v1579, %v1587
    %v1590 = vtanh.pop %v1589
    %1592 = vrot.lane.b32.xlu0 %v1590, 32
    %v1593 = vpop.permute.xlu0 %1592
    %v1595 = vmul.f32 %v1577, %v1593
    %1597 = vrot.lane.b32.xlu0 %v1595, 80
    %v1598 = vpop.permute.xlu0 %1597
    %1600 = vst.msk [vmem:[#allocation3 + $0x6] sm:$0x1] %vm351, %v1598
    %v1601 = vld [vmem:[#allocation2 + $0x7] sm:$0x1]
    %v1602 = vsel %vm145, %v1493, 0
    %1604 = vmatprep.subr.mxu0 0.0
    %1605 = vmatpush1.msra.mxu0 %v133
    %1606 = vmatprep.subr.mxu0 0.0
    %1607 = vmatpush1.msra.mxu0 %v134
    %1608 = vmatprep.subr.mxu0 0.0
    %1609 = vmatpush1.msra.mxu0 %v135
    %1610 = vmatprep.subr.mxu0 0.0
    %1611 = vmatpush1.msra.mxu0 %v136
    %1612 = vmatprep.subr.mxu0 0.0
    %1613 = vmatpush1.msra.mxu0 0.0
    %1614 = vmatprep.subr.mxu0 0.0
    %1615 = vmatpush1.msra.mxu0 0.0
    %1616 = vmatprep.subr.mxu0 0.0
    %1617 = vmatpush1.msra.mxu0 0.0
    %1618 = vmatprep.subr.mxu0 0.0
    %1619 = vmatpush1.msra.mxu0 0.0
    %1620 = vmatprep.subr.mxu0 0.0
    %1621 = vmatpush1.msra.mxu0 0.0
    %1622 = vmatprep.subr.mxu0 0.0
    %1623 = vmatpush1.msra.mxu0 0.0
    %1624 = vmatprep.subr.mxu0 0.0
    %1625 = vmatpush1.msra.mxu0 0.0
    %1626 = vmatprep.subr.mxu0 0.0
    %1627 = vmatpush1.msra.mxu0 0.0
    %1628 = vmatprep.subr.mxu0 0.0
    %1629 = vmatpush1.msra.mxu0 0.0
    %1630 = vmatprep.subr.mxu0 0.0
    %1631 = vmatpush1.msra.mxu0 0.0
    %1632 = vmatprep.subr.mxu0 0.0
    %1633 = vmatpush1.msra.mxu0 0.0
    %1634 = vmatprep.subr.mxu0 0.0
    %1635 = vmatpush1.msra.mxu0 0.0
    %1636 = vmatprep.subr.mxu0 0.0
    %1637 = vmatpush1.msra.mxu0 0.0
    %1638 = vmatprep.subr.mxu0 0.0
    %1639 = vmatpush1.msra.mxu0 0.0
    %1640 = vmatprep.subr.mxu0 0.0
    %1641 = vmatpush1.msra.mxu0 0.0
    %1642 = vmatprep.subr.mxu0 0.0
    %1643 = vmatpush1.msra.mxu0 0.0
    %1644 = vmatprep.subr.mxu0 0.0
    %1645 = vmatpush1.msra.mxu0 0.0
    %1646 = vmatprep.subr.mxu0 0.0
    %1647 = vmatpush1.msra.mxu0 0.0
    %1648 = vmatprep.subr.mxu0 0.0
    %1649 = vmatpush1.msra.mxu0 0.0
    %1650 = vmatprep.subr.mxu0 0.0
    %1651 = vmatpush1.msra.mxu0 0.0
    %1652 = vmatprep.subr.mxu0 0.0
    %1653 = vmatpush1.msra.mxu0 0.0
    %1654 = vmatprep.subr.mxu0 0.0
    %1655 = vmatpush1.msra.mxu0 0.0
    %1656 = vmatprep.subr.mxu0 0.0
    %1657 = vmatpush1.msra.mxu0 0.0
    %1658 = vmatprep.subr.mxu0 0.0
    %1659 = vmatpush1.msra.mxu0 0.0
    %1660 = vmatprep.subr.mxu0 0.0
    %1661 = vmatpush1.msra.mxu0 0.0
    %1662 = vmatprep.subr.mxu0 0.0
    %1663 = vmatpush1.msra.mxu0 0.0
    %1664 = vmatprep.subr.mxu0 0.0
    %1665 = vmatpush1.msra.mxu0 0.0
    %1666 = vmatprep.subr.mxu0 0.0
    %1667 = vmatpush1.msra.mxu0 0.0
    %1668 = vmatprep.mubr.f32.mxu0 0.0
    %1669 = vmatmul.mubr.f32.gmra.mrb[0].mxu0 %v1602
    %v1670 = vpop.f32.mrb[0].mxu0
    %v1671 = vadd.f32 0.0, %v1670
    %v1672 = vpop.f32.mrb[0].mxu0
    %1673 = vdwg.mxu0
    %v1674 = vadd.f32 %v1601, %v1671
    %v1675 = vxor.u32 %v1674, 2147483648
    %v1676 = vmul.f32 %v1675, 1.442695
    %v1677 = vpow.pop %v1676
    %v1678 = vadd.f32 %v1677, 1.0
    %v1679 = vrcp.pop %v1678
    %v1680 = vmul.f32 1.0, %v1679
    %v1681 = vtanh.pop %v1674
    %v1682 = vmul.f32 %v1680, %v1484
    %1684 = vrot.lane.b32.xlu0 %v1681, 64
    %v1685 = vpop.permute.xlu0 %1684
    %v1687 = vmul.f32 %v1680, %v1685
    %1689 = vrot.lane.b32.xlu0 %v1687, 32
    %v1690 = vpop.permute.xlu0 %1689
    %v1692 = vadd.f32 %v1682, %v1690
    %v1693 = vtanh.pop %v1692
    %1695 = vrot.lane.b32.xlu0 %v1693, 64
    %v1696 = vpop.permute.xlu0 %1695
    %v1698 = vmul.f32 %v1680, %v1696
    %1700 = vrot.lane.b32.xlu0 %v1698, 32
    %v1701 = vpop.permute.xlu0 %1700
    %1703 = vrot.lane.b32.xlu0 %v1595, 112
    %v1704 = vpop.permute.xlu0 %1703
    %v1706 = vsel %vm145, %v1701, %v1704
    %v1708 = vsel %vm249, %v1706, 0
    %1710 = vmatprep.subr.mxu0 0.0
    %1711 = vmatpush1.msra.mxu0 %v137
    %1712 = vmatprep.subr.mxu0 0.0
    %1713 = vmatpush1.msra.mxu0 %v138
    %1714 = vmatprep.subr.mxu0 0.0
    %1715 = vmatpush1.msra.mxu0 %v139
    %1716 = vmatprep.subr.mxu0 0.0
    %1717 = vmatpush1.msra.mxu0 %v140
    %1718 = vmatprep.subr.mxu0 0.0
    %1719 = vmatpush1.msra.mxu0 %v141
    %1720 = vmatprep.subr.mxu0 0.0
    %1721 = vmatpush1.msra.mxu0 %v142
    %1722 = vmatprep.subr.mxu0 0.0
    %1723 = vmatpush1.msra.mxu0 0.0
    %1724 = vmatprep.subr.mxu0 0.0
    %1725 = vmatpush1.msra.mxu0 0.0
    %1726 = vmatprep.subr.mxu0 0.0
    %1727 = vmatpush1.msra.mxu0 0.0
    %1728 = vmatprep.subr.mxu0 0.0
    %1729 = vmatpush1.msra.mxu0 0.0
    %1730 = vmatprep.subr.mxu0 0.0
    %1731 = vmatpush1.msra.mxu0 0.0
    %1732 = vmatprep.subr.mxu0 0.0
    %1733 = vmatpush1.msra.mxu0 0.0
    %1734 = vmatprep.subr.mxu0 0.0
    %1735 = vmatpush1.msra.mxu0 0.0
    %1736 = vmatprep.subr.mxu0 0.0
    %1737 = vmatpush1.msra.mxu0 0.0
    %1738 = vmatprep.subr.mxu0 0.0
    %1739 = vmatpush1.msra.mxu0 0.0
    %1740 = vmatprep.subr.mxu0 0.0
    %1741 = vmatpush1.msra.mxu0 0.0
    %1742 = vmatprep.subr.mxu0 0.0
    %1743 = vmatpush1.msra.mxu0 0.0
    %1744 = vmatprep.subr.mxu0 0.0
    %1745 = vmatpush1.msra.mxu0 0.0
    %1746 = vmatprep.subr.mxu0 0.0
    %1747 = vmatpush1.msra.mxu0 0.0
    %1748 = vmatprep.subr.mxu0 0.0
    %1749 = vmatpush1.msra.mxu0 0.0
    %1750 = vmatprep.subr.mxu0 0.0
    %1751 = vmatpush1.msra.mxu0 0.0
    %1752 = vmatprep.subr.mxu0 0.0
    %1753 = vmatpush1.msra.mxu0 0.0
    %1754 = vmatprep.subr.mxu0 0.0
    %1755 = vmatpush1.msra.mxu0 0.0
    %1756 = vmatprep.subr.mxu0 0.0
    %1757 = vmatpush1.msra.mxu0 0.0
    %1758 = vmatprep.subr.mxu0 0.0
    %1759 = vmatpush1.msra.mxu0 0.0
    %1760 = vmatprep.subr.mxu0 0.0
    %1761 = vmatpush1.msra.mxu0 0.0
    %1762 = vmatprep.subr.mxu0 0.0
    %1763 = vmatpush1.msra.mxu0 0.0
    %1764 = vmatprep.subr.mxu0 0.0
    %1765 = vmatpush1.msra.mxu0 0.0
    %1766 = vmatprep.subr.mxu0 0.0
    %1767 = vmatpush1.msra.mxu0 0.0
    %1768 = vmatprep.subr.mxu0 0.0
    %1769 = vmatpush1.msra.mxu0 0.0
    %1770 = vmatprep.subr.mxu0 0.0
    %1771 = vmatpush1.msra.mxu0 0.0
    %1772 = vmatprep.subr.mxu0 0.0
    %1773 = vmatpush1.msra.mxu0 0.0
    %1774 = vmatprep.mubr.f32.mxu0 0.0
    %1775 = vmatmul.mubr.f32.gmra.mrb[0].mxu0 %v1708
    %v1776 = vpop.f32.mrb[0].mxu0
    %v1777 = vadd.f32 %v143, %v1776
    %v1778 = vpop.f32.mrb[0].mxu0
    %1779 = vdwg.mxu0
    %v1780 = vxor.u32 %v1777, 2147483648
    %v1781 = vmul.f32 %v1780, 1.442695
    %v1782 = vpow.pop %v1781
    %v1783 = vadd.f32 %v1782, 1.0
    %v1784 = vrcp.pop %v1783
    %v1785 = vmul.f32 1.0, %v1784
    %v1786 = vtanh.pop %v1777
    %v1787 = vmul.f32 %v1785, %v1589
    %1789 = vrot.lane.b32.xlu0 %v1786, 96
    %v1790 = vpop.permute.xlu0 %1789
    %v1792 = vmul.f32 %v1785, %v1790
    %1794 = vrot.lane.b32.xlu0 %v1792, 16
    %v1795 = vpop.permute.xlu0 %1794
    %v1797 = vadd.f32 %v1787, %v1795
    %v1798 = vtanh.pop %v1797
    %1800 = vrot.lane.b32.xlu0 %v1798, 32
    %v1801 = vpop.permute.xlu0 %1800
    %v1803 = vmul.f32 %v1785, %v1801
    %1805 = vrot.lane.b32.xlu0 %v1803, 80
    %v1806 = vpop.permute.xlu0 %1805
    %1808 = vst.msk [vmem:[#allocation3 + $0x7] sm:$0x1] %vm351, %v1806
    %v1809 = vld [vmem:[#allocation3] sm:$0xff]
    %v1810 = vld [vmem:[%s6] sm:$0xff]
    %v1811 = vld [vmem:[%s6 + $0x8] sm:$0xff]
    %v1812 = vld [vmem:[#allocation4] sm:$0x1]
    %v1814 = vlaneseq
    %v1815 = vshrl.u32 %v1814, 7
    %v1816 = vsub.s32 0, %v1815
    %v1817 = vrot.slane %v1812, %v1816
    %vm1819 = vcmask 130048
    %v1821 = vsel %vm1819, %v1809, 0
    %1823 = vmatprep.subr.mxu0 0.0
    %1824 = vmatpush1.msra.mxu0 %v1810
    %1825 = vmatprep.subr.mxu0 0.0
    %1826 = vmatpush1.msra.mxu0 %v1811
    %1827 = vmatprep.subr.mxu0 0.0
    %1828 = vmatpush1.msra.mxu0 0.0
    %1829 = vmatprep.subr.mxu0 0.0
    %1830 = vmatpush1.msra.mxu0 0.0
    %1831 = vmatprep.subr.mxu0 0.0
    %1832 = vmatpush1.msra.mxu0 0.0
    %1833 = vmatprep.subr.mxu0 0.0
    %1834 = vmatpush1.msra.mxu0 0.0
    %1835 = vmatprep.subr.mxu0 0.0
    %1836 = vmatpush1.msra.mxu0 0.0
    %1837 = vmatprep.subr.mxu0 0.0
    %1838 = vmatpush1.msra.mxu0 0.0
    %1839 = vmatprep.subr.mxu0 0.0
    %1840 = vmatpush1.msra.mxu0 0.0
    %1841 = vmatprep.subr.mxu0 0.0
    %1842 = vmatpush1.msra.mxu0 0.0
    %1843 = vmatprep.subr.mxu0 0.0
    %1844 = vmatpush1.msra.mxu0 0.0
    %1845 = vmatprep.subr.mxu0 0.0
    %1846 = vmatpush1.msra.mxu0 0.0
    %1847 = vmatprep.subr.mxu0 0.0
    %1848 = vmatpush1.msra.mxu0 0.0
    %1849 = vmatprep.subr.mxu0 0.0
    %1850 = vmatpush1.msra.mxu0 0.0
    %1851 = vmatprep.subr.mxu0 0.0
    %1852 = vmatpush1.msra.mxu0 0.0
    %1853 = vmatprep.subr.mxu0 0.0
    %1854 = vmatpush1.msra.mxu0 0.0
    %1855 = vmatprep.subr.mxu0 0.0
    %1856 = vmatpush1.msra.mxu0 0.0
    %1857 = vmatprep.subr.mxu0 0.0
    %1858 = vmatpush1.msra.mxu0 0.0
    %1859 = vmatprep.subr.mxu0 0.0
    %1860 = vmatpush1.msra.mxu0 0.0
    %1861 = vmatprep.subr.mxu0 0.0
    %1862 = vmatpush1.msra.mxu0 0.0
    %1863 = vmatprep.subr.mxu0 0.0
    %1864 = vmatpush1.msra.mxu0 0.0
    %1865 = vmatprep.subr.mxu0 0.0
    %1866 = vmatpush1.msra.mxu0 0.0
    %1867 = vmatprep.subr.mxu0 0.0
    %1868 = vmatpush1.msra.mxu0 0.0
    %1869 = vmatprep.subr.mxu0 0.0
    %1870 = vmatpush1.msra.mxu0 0.0
    %1871 = vmatprep.subr.mxu0 0.0
    %1872 = vmatpush1.msra.mxu0 0.0
    %1873 = vmatprep.subr.mxu0 0.0
    %1874 = vmatpush1.msra.mxu0 0.0
    %1875 = vmatprep.subr.mxu0 0.0
    %1876 = vmatpush1.msra.mxu0 0.0
    %1877 = vmatprep.subr.mxu0 0.0
    %1878 = vmatpush1.msra.mxu0 0.0
    %1879 = vmatprep.subr.mxu0 0.0
    %1880 = vmatpush1.msra.mxu0 0.0
    %1881 = vmatprep.subr.mxu0 0.0
    %1882 = vmatpush1.msra.mxu0 0.0
    %1883 = vmatprep.subr.mxu0 0.0
    %1884 = vmatpush1.msra.mxu0 0.0
    %1885 = vmatprep.subr.mxu0 0.0
    %1886 = vmatpush1.msra.mxu0 0.0
    %1887 = vmatprep.mubr.f32.mxu0 0.0
    %1888 = vmatmul.mubr.f32.gmra.mrb[0].mxu0 %v1821
    %v1889 = vpop.f32.mrb[0].mxu0
    %v1890 = vadd.f32 %v1817, %v1889
    %v1891 = vpop.f32.mrb[0].mxu0
    %1892 = vdwg.mxu0
    %vm1893 = vcmask 7168
    %1894 = vst.msk [vmem:[%s8] sm:$0xff] %vm1893, %v1890
    // Predicated region
    $region38: #{tpu_custom_call.1} parent=1 // pred_check
      _
    $region39: #{tpu_custom_call.1} parent=1 // pred_check_branch
      %1896 = sbr.rel (0) target = $region41
    $region40: #{tpu_custom_call.1} parent=1 // pred_region
      _
    $region41: #{tpu_custom_call.1} parent=1 // pred_fallthru
      _
    // Predicated region
    $region42: #{tpu_custom_call.1} parent=1 // pred_check
      _
    $region43: #{tpu_custom_call.1} parent=1 // pred_check_branch
      %1898 = sbr.rel (0) target = $region45
    $region44: #{tpu_custom_call.1} parent=1 // pred_region
      _
    $region45: #{tpu_custom_call.1} parent=1 // pred_fallthru
      _
    %1899 = vsyncpa [#allocation6], 1

</llo_original>
